<compile_context>
chip_gen: v7x
topology: tpu7x:2x2x1
jax: 0.10.0
libtpu: 0.0.40
codegen_flags: <defaults>
</compile_context>

<pallas_src>
import functools

import jax
import jax.numpy as jnp
from jax.experimental import pallas as pl
from jax.experimental.pallas import tpu as pltpu

D_IN = 130      # true input features
D_OUT = 7       # true output features
LANE = 128      # padded hidden width (matches vreg lanes / MXU)
OUT_PAD = 8     # narrow padded output width actually written to HBM


def mlp_kernel(x_ref,
               w1_ref, b1_ref,
               w2_ref, b2_ref,
               w3_ref, b3_ref,
               w4_ref, b4_ref,
               o_ref):
    """Fused 4-layer MLP forward for one batch tile. bf16 MXU inputs, f32 accum."""
    x = x_ref[...].astype(jnp.bfloat16)                          # (tb, 130) cast in-kernel

    h = jnp.dot(x, w1_ref[...], preferred_element_type=jnp.float32) + b1_ref[...]
    h = jnp.maximum(h, 0.0).astype(jnp.bfloat16)                 # (tb, 128)

    h = jnp.dot(h, w2_ref[...], preferred_element_type=jnp.float32) + b2_ref[...]
    h = jnp.maximum(h, 0.0).astype(jnp.bfloat16)                 # (tb, 128)

    h = jnp.dot(h, w3_ref[...], preferred_element_type=jnp.float32) + b3_ref[...]
    h = jnp.maximum(h, 0.0).astype(jnp.bfloat16)                 # (tb, 128)

    out = jnp.dot(h, w4_ref[...], preferred_element_type=jnp.float32) + b4_ref[...]
    # Only the first OUT_PAD (=8 >= 7) columns are real; keep HBM writeback narrow.
    o_ref[...] = out[:, :OUT_PAD].astype(o_ref.dtype)            # (tb, 8) f32


@functools.partial(jax.jit, static_argnames=("block_b",))
def mlp_forward(x, params, block_b=None):
    """x: (B, 130) float32. params: lane-padded bf16 weights + f32 biases.

    Returns (B, 7) float32 == ReLU-MLP forward of the original PyTorch module.
    """
    B, d_in = x.shape
    assert d_in == D_IN, d_in

    # Tile selection: for small/medium batches use exactly 2 balanced steps so a
    # v7x megacore splits the "parallel" batch axis evenly; cap tiles at 2048.
    if block_b is None:
        target = 2048
        if B <= 2 * target:
            block_b = max(8, ((pl.cdiv(B, 2) + 7) // 8) * 8)   # sublane multiple
        else:
            block_b = target
    assert block_b % 8 == 0, block_b
    n_steps = pl.cdiv(B, block_b)   # ragged tail handled by Pallas bounds masking

    # Weights/biases are small and loop-invariant: constant block index -> one DMA.
    def const_spec(shape):
        return pl.BlockSpec(shape, lambda i: (0, 0))

    in_specs = [
        pl.BlockSpec((block_b, D_IN), lambda i: (i, 0)),        # x: tiled over batch
        const_spec(params["w1"].shape), const_spec(params["b1"].shape),
        const_spec(params["w2"].shape), const_spec(params["b2"].shape),
        const_spec(params["w3"].shape), const_spec(params["b3"].shape),
        const_spec(params["w4"].shape), const_spec(params["b4"].shape),
    ]
    out_specs = pl.BlockSpec((block_b, OUT_PAD), lambda i: (i, 0))

    # Advisory cost estimate (post byte-reduction changes) for XLA scheduling.
    flops = 2 * B * (D_IN * LANE + 3 * LANE * LANE)
    param_bytes = (D_IN * LANE + 3 * LANE * LANE) * 2 + 4 * LANE * 4
    bytes_accessed = B * D_IN * 4 + B * OUT_PAD * 4 + param_bytes
    cost = pl.CostEstimate(flops=flops, transcendentals=0,
                           bytes_accessed=bytes_accessed)

    out = pl.pallas_call(
        mlp_kernel,
        out_shape=jax.ShapeDtypeStruct((B, OUT_PAD), jnp.float32),
        grid_spec=pltpu.PrefetchScalarGridSpec(
            num_scalar_prefetch=0,
            grid=(n_steps,),
            in_specs=in_specs,
            out_specs=out_specs,
        ),
        compiler_params=pltpu.CompilerParams(
            dimension_semantics=("parallel",),     # megacore-shard batch axis (v7x)
            vmem_limit_bytes=32 * 1024 * 1024,     # headroom on all generations
        ),
        cost_estimate=cost,
    )(x,
      params["w1"], params["b1"],
      params["w2"], params["b2"],
      params["w3"], params["b3"],
      params["w4"], params["b4"])

    return out[:, :D_OUT]


def init_params(key):
    """nn.Linear-style U(-1/sqrt(fan_in), 1/sqrt(fan_in)) init, zero-padded to
    lane-dense shapes. Weights stored (in, out) bf16; biases (1, out) f32."""
    dims = [(130, 100), (100, 100), (100, 50), (50, 7)]
    pads = [(D_IN, LANE), (LANE, LANE), (LANE, LANE), (LANE, LANE)]
    params = {}
    for idx, ((fan_in, fan_out), (pin, pout)) in enumerate(zip(dims, pads), start=1):
        key, kw, kb = jax.random.split(key, 3)
        bound = 1.0 / float(fan_in) ** 0.5
        w = jax.random.uniform(kw, (fan_in, fan_out), jnp.float32, -bound, bound)
        b = jax.random.uniform(kb, (fan_out,), jnp.float32, -bound, bound)
        w_pad = jnp.zeros((pin, pout), jnp.float32).at[:fan_in, :fan_out].set(w)
        b_pad = jnp.zeros((1, pout), jnp.float32).at[0, :fan_out].set(b)
        params[f"w{idx}"] = w_pad.astype(jnp.bfloat16)   # MXU inputs in bf16
        params[f"b{idx}"] = b_pad                        # biases stay f32
    return params


def mlp_reference(x, params):
    """Pure-JAX reference (f32 math on bf16-rounded inputs/weights)."""
    x = x.astype(jnp.bfloat16).astype(jnp.float32)
    w1 = params["w1"].astype(jnp.float32)
    w2 = params["w2"].astype(jnp.float32)
    w3 = params["w3"].astype(jnp.float32)
    w4 = params["w4"].astype(jnp.float32)
    h = jnp.maximum(x @ w1 + params["b1"], 0.0)
    h = jnp.maximum(h @ w2 + params["b2"], 0.0)
    h = jnp.maximum(h @ w3 + params["b3"], 0.0)
    out = h @ w4 + params["b4"]
    return out[:, :D_OUT]


if __name__ == "__main__":
    key = jax.random.PRNGKey(0)
    key, kx = jax.random.split(key)

    # Ragged batch (1000): auto tile -> block_b=504, exactly 2 balanced grid
    # steps (one per v7x TensorCore), last block bounds-masked by Pallas.
    B = 1000
    x = jax.random.normal(kx, (B, D_IN), dtype=jnp.float32)
    params = init_params(key)

    out = mlp_forward(x, params)
    out = jax.block_until_ready(out)

    ref = mlp_reference(x, params)
    assert out.shape == (B, D_OUT), out.shape
    # bf16 activations inside the kernel vs f32 activations in the reference.
    assert jnp.allclose(out, ref, atol=3e-2, rtol=3e-2), \
        f"mismatch vs reference, max abs diff {jnp.max(jnp.abs(out - ref))}"

    print("KERNEL_OK")
</pallas_src>

<mosaic_0001>
module attributes {stable_mosaic.version = 11 : i64} {
  func.func @mlp_kernel(%arg0: i32, %arg1: memref<504x130xf32, #tpu.memory_space<vmem>>, %arg2: memref<130x128xbf16, #tpu.memory_space<vmem>>, %arg3: memref<1x128xf32, #tpu.memory_space<vmem>>, %arg4: memref<128x128xbf16, #tpu.memory_space<vmem>>, %arg5: memref<1x128xf32, #tpu.memory_space<vmem>>, %arg6: memref<128x128xbf16, #tpu.memory_space<vmem>>, %arg7: memref<1x128xf32, #tpu.memory_space<vmem>>, %arg8: memref<128x128xbf16, #tpu.memory_space<vmem>>, %arg9: memref<1x128xf32, #tpu.memory_space<vmem>>, %arg10: memref<504x8xf32, #tpu.memory_space<vmem>>) attributes {dimension_semantics = [#tpu.dimension_semantics<parallel>], iteration_bounds = array<i64: 2>, scalar_prefetch = 0 : i64, scratch_operands = 0 : i64, tpu.core_type = #tpu.core_type<tc>, window_params = [{transform_indices = @transform_0, window_bounds = array<i64: 504, 130>}, {pipeline_mode = #tpu.pipeline_mode<synchronous>, transform_indices = @transform_1, window_bounds = array<i64: 130, 128>}, {pipeline_mode = #tpu.pipeline_mode<synchronous>, transform_indices = @transform_2, window_bounds = array<i64: 1, 128>}, {pipeline_mode = #tpu.pipeline_mode<synchronous>, transform_indices = @transform_3, window_bounds = array<i64: 128, 128>}, {pipeline_mode = #tpu.pipeline_mode<synchronous>, transform_indices = @transform_4, window_bounds = array<i64: 1, 128>}, {pipeline_mode = #tpu.pipeline_mode<synchronous>, transform_indices = @transform_5, window_bounds = array<i64: 128, 128>}, {pipeline_mode = #tpu.pipeline_mode<synchronous>, transform_indices = @transform_6, window_bounds = array<i64: 1, 128>}, {pipeline_mode = #tpu.pipeline_mode<synchronous>, transform_indices = @transform_7, window_bounds = array<i64: 128, 128>}, {pipeline_mode = #tpu.pipeline_mode<synchronous>, transform_indices = @transform_8, window_bounds = array<i64: 1, 128>}, {transform_indices = @transform_9, window_bounds = array<i64: 504, 8>}]} {
    %c0 = arith.constant 0 : index
    %c0_0 = arith.constant 0 : index
    %0 = vector.load %arg1[%c0, %c0_0] : memref<504x130xf32, #tpu.memory_space<vmem>>, vector<504x130xf32>
    %1 = arith.truncf %0 : vector<504x130xf32> to vector<504x130xbf16>
    %c0_1 = arith.constant 0 : index
    %c0_2 = arith.constant 0 : index
    %2 = vector.load %arg2[%c0_1, %c0_2] : memref<130x128xbf16, #tpu.memory_space<vmem>>, vector<130x128xbf16>
    %cst = arith.constant dense<0.000000e+00> : vector<504x128xf32>
    %3 = tpu.matmul %1, %2, %cst {dimension_numbers = #tpu.dot_dimension_numbers<[1], [0], [0], [1], [0, 0, 1, 1], [], []>} : vector<504x130xbf16>, vector<130x128xbf16>, vector<504x128xf32> -> vector<504x128xf32>
    %c0_3 = arith.constant 0 : index
    %c0_4 = arith.constant 0 : index
    %4 = vector.load %arg3[%c0_3, %c0_4] : memref<1x128xf32, #tpu.memory_space<vmem>>, vector<1x128xf32>
    %5 = vector.broadcast %4 : vector<1x128xf32> to vector<504x128xf32>
    %6 = arith.addf %3, %5 : vector<504x128xf32>
    %cst_5 = arith.constant 0.000000e+00 : f32
    %7 = vector.broadcast %cst_5 : f32 to vector<504x128xf32>
    %8 = arith.maximumf %6, %7 : vector<504x128xf32>
    %9 = arith.truncf %8 : vector<504x128xf32> to vector<504x128xbf16>
    %c0_6 = arith.constant 0 : index
    %c0_7 = arith.constant 0 : index
    %10 = vector.load %arg4[%c0_6, %c0_7] : memref<128x128xbf16, #tpu.memory_space<vmem>>, vector<128x128xbf16>
    %cst_8 = arith.constant dense<0.000000e+00> : vector<504x128xf32>
    %11 = tpu.matmul %9, %10, %cst_8 {dimension_numbers = #tpu.dot_dimension_numbers<[1], [0], [0], [1], [0, 0, 1, 1], [], []>} : vector<504x128xbf16>, vector<128x128xbf16>, vector<504x128xf32> -> vector<504x128xf32>
    %c0_9 = arith.constant 0 : index
    %c0_10 = arith.constant 0 : index
    %12 = vector.load %arg5[%c0_9, %c0_10] : memref<1x128xf32, #tpu.memory_space<vmem>>, vector<1x128xf32>
    %13 = vector.broadcast %12 : vector<1x128xf32> to vector<504x128xf32>
    %14 = arith.addf %11, %13 : vector<504x128xf32>
    %cst_11 = arith.constant 0.000000e+00 : f32
    %15 = vector.broadcast %cst_11 : f32 to vector<504x128xf32>
    %16 = arith.maximumf %14, %15 : vector<504x128xf32>
    %17 = arith.truncf %16 : vector<504x128xf32> to vector<504x128xbf16>
    %c0_12 = arith.constant 0 : index
    %c0_13 = arith.constant 0 : index
    %18 = vector.load %arg6[%c0_12, %c0_13] : memref<128x128xbf16, #tpu.memory_space<vmem>>, vector<128x128xbf16>
    %cst_14 = arith.constant dense<0.000000e+00> : vector<504x128xf32>
    %19 = tpu.matmul %17, %18, %cst_14 {dimension_numbers = #tpu.dot_dimension_numbers<[1], [0], [0], [1], [0, 0, 1, 1], [], []>} : vector<504x128xbf16>, vector<128x128xbf16>, vector<504x128xf32> -> vector<504x128xf32>
    %c0_15 = arith.constant 0 : index
    %c0_16 = arith.constant 0 : index
    %20 = vector.load %arg7[%c0_15, %c0_16] : memref<1x128xf32, #tpu.memory_space<vmem>>, vector<1x128xf32>
    %21 = vector.broadcast %20 : vector<1x128xf32> to vector<504x128xf32>
    %22 = arith.addf %19, %21 : vector<504x128xf32>
    %cst_17 = arith.constant 0.000000e+00 : f32
    %23 = vector.broadcast %cst_17 : f32 to vector<504x128xf32>
    %24 = arith.maximumf %22, %23 : vector<504x128xf32>
    %25 = arith.truncf %24 : vector<504x128xf32> to vector<504x128xbf16>
    %c0_18 = arith.constant 0 : index
    %c0_19 = arith.constant 0 : index
    %26 = vector.load %arg8[%c0_18, %c0_19] : memref<128x128xbf16, #tpu.memory_space<vmem>>, vector<128x128xbf16>
    %cst_20 = arith.constant dense<0.000000e+00> : vector<504x128xf32>
    %27 = tpu.matmul %25, %26, %cst_20 {dimension_numbers = #tpu.dot_dimension_numbers<[1], [0], [0], [1], [0, 0, 1, 1], [], []>} : vector<504x128xbf16>, vector<128x128xbf16>, vector<504x128xf32> -> vector<504x128xf32>
    %c0_21 = arith.constant 0 : index
    %c0_22 = arith.constant 0 : index
    %28 = vector.load %arg9[%c0_21, %c0_22] : memref<1x128xf32, #tpu.memory_space<vmem>>, vector<1x128xf32>
    %29 = vector.broadcast %28 : vector<1x128xf32> to vector<504x128xf32>
    %30 = arith.addf %27, %29 : vector<504x128xf32>
    %31 = vector.extract_strided_slice %30 {offsets = [0, 0], sizes = [504, 8], strides = [1, 1]} : vector<504x128xf32> to vector<504x8xf32>
    %c0_23 = arith.constant 0 : index
    %c0_24 = arith.constant 0 : index
    %32 = vector.load %arg10[%c0_23, %c0_24] : memref<504x8xf32, #tpu.memory_space<vmem>>, vector<504x8xf32>
    tpu.vector_store %arg10[%c0_23, %c0_24], %31 {strides = array<i32>} : memref<504x8xf32, #tpu.memory_space<vmem>>, vector<504x8xf32>,
    return
  }
  func.func @transform_0(%arg0: i32) -> (i32, i32) {
    %c0_i32 = arith.constant 0 : i32
    %c0_i32_0 = arith.constant 0 : i32
    return %arg0, %c0_i32 : i32, i32
  }
  func.func @transform_1(%arg0: i32) -> (i32, i32) {
    %c0_i32 = arith.constant 0 : i32
    %c0_i32_0 = arith.constant 0 : i32
    %c0_i32_1 = arith.constant 0 : i32
    return %c0_i32, %c0_i32_0 : i32, i32
  }
  func.func @transform_2(%arg0: i32) -> (i32, i32) {
    %c0_i32 = arith.constant 0 : i32
    %c0_i32_0 = arith.constant 0 : i32
    %c0_i32_1 = arith.constant 0 : i32
    return %c0_i32, %c0_i32_0 : i32, i32
  }
  func.func @transform_3(%arg0: i32) -> (i32, i32) {
    %c0_i32 = arith.constant 0 : i32
    %c0_i32_0 = arith.constant 0 : i32
    %c0_i32_1 = arith.constant 0 : i32
    return %c0_i32, %c0_i32_0 : i32, i32
  }
  func.func @transform_4(%arg0: i32) -> (i32, i32) {
    %c0_i32 = arith.constant 0 : i32
    %c0_i32_0 = arith.constant 0 : i32
    %c0_i32_1 = arith.constant 0 : i32
    return %c0_i32, %c0_i32_0 : i32, i32
  }
  func.func @transform_5(%arg0: i32) -> (i32, i32) {
    %c0_i32 = arith.constant 0 : i32
    %c0_i32_0 = arith.constant 0 : i32
    %c0_i32_1 = arith.constant 0 : i32
    return %c0_i32, %c0_i32_0 : i32, i32
  }
  func.func @transform_6(%arg0: i32) -> (i32, i32) {
    %c0_i32 = arith.constant 0 : i32
    %c0_i32_0 = arith.constant 0 : i32
    %c0_i32_1 = arith.constant 0 : i32
    return %c0_i32, %c0_i32_0 : i32, i32
  }
  func.func @transform_7(%arg0: i32) -> (i32, i32) {
    %c0_i32 = arith.constant 0 : i32
    %c0_i32_0 = arith.constant 0 : i32
    %c0_i32_1 = arith.constant 0 : i32
    return %c0_i32, %c0_i32_0 : i32, i32
  }
  func.func @transform_8(%arg0: i32) -> (i32, i32) {
    %c0_i32 = arith.constant 0 : i32
    %c0_i32_0 = arith.constant 0 : i32
    %c0_i32_1 = arith.constant 0 : i32
    return %c0_i32, %c0_i32_0 : i32, i32
  }
  func.func @transform_9(%arg0: i32) -> (i32, i32) {
    %c0_i32 = arith.constant 0 : i32
    %c0_i32_0 = arith.constant 0 : i32
    return %arg0, %c0_i32 : i32, i32
  }
}

</mosaic_0001>

<llo_original>
// kernel: mlp_forward.1
$region0: #{mlp_forward.1}
  #allocation0 [shape = 'u32[]', space=smem, size = 0x4, offset = 0x4, fixed_abs, tag = 'smem constant byte address 0x4 - core index']
  #allocation1 [shape = 'u32[144,128]{1,0:T(1,128)}', space=vmem, size = 0x12000, scoped, tag = 'internal scratch']
  %s0 = inlined_call_operand.vmem [shape: f32[1000,130], index: 0, kind: input, shape index: {}]
  %s1 = inlined_call_operand.vmem [shape: bf16[130,128], index: 1, kind: input, shape index: {}]
  %s2 = inlined_call_operand.vmem [shape: f32[1,128], index: 2, kind: input, shape index: {}]
  %s3 = inlined_call_operand.vmem [shape: bf16[128,128], index: 3, kind: input, shape index: {}]
  %s4 = inlined_call_operand.vmem [shape: f32[1,128], index: 4, kind: input, shape index: {}]
  %s5 = inlined_call_operand.vmem [shape: bf16[128,128], index: 5, kind: input, shape index: {}]
  %s6 = inlined_call_operand.vmem [shape: f32[1,128], index: 6, kind: input, shape index: {}]
  %s7 = inlined_call_operand.vmem [shape: bf16[128,128], index: 7, kind: input, shape index: {}]
  %s8 = inlined_call_operand.vmem [shape: f32[1,128], index: 8, kind: input, shape index: {}]
  %s9 = inlined_call_operand.vmem [shape: f32[1000,8], index: 9, kind: output, shape index: {}]
  %s10 = sld [smem:[#allocation0]]
  $region117: #{mlp_forward.1} parent=0
    _
  %s12 = ssub.s32 1, %s10
  %s13 = scalar_select 0, %s12, %s10
  $region1: #{mlp_forward.1} parent=0
    #allocation2 [shape = 'u8[516096]{0}', space=vmem, size = 0x7e000, scoped, tag = 'output window, operand 0']
    loop: start=0, step=1, limit=4
    $region2: #{mlp_forward.1} parent=1 // loop_pre_header
      _
    $region3: #{mlp_forward.1} parent=1 // loop_header
      %s15 = sphi 0, %s19
      %p16 = scmp.ge.s32.totalorder %s15, 4
      %s25 = sphi 0, %s27
      %s28 = sphi 0, %s25
      %s29 = sphi 0, %s28
      %s45 = sphi 0, %s29
      %s49 = sphi 0, %s49
      %s51 = sphi 0, %s49
      %s52 = sphi 0, %s51
      %s66 = sphi 0, %s52
      %s70 = sphi 0, %s70
      %s72 = sphi 0, %s70
      %s73 = sphi 0, %s72
      %s87 = sphi 0, %s73
      %s91 = sphi 0, %s91
      %s93 = sphi 0, %s91
      %s94 = sphi 0, %s93
      %s108 = sphi 0, %s94
      %s112 = sphi 0, %s112
      %s114 = sphi 0, %s112
      %s115 = sphi 0, %s114
      %s129 = sphi 0, %s115
      %s133 = sphi 0, %s133
      %s135 = sphi 0, %s133
      %s136 = sphi 0, %s135
      %s150 = sphi 0, %s136
      %s154 = sphi 0, %s154
      %s156 = sphi 0, %s154
      %s157 = sphi 0, %s156
      %s171 = sphi 0, %s157
      %s175 = sphi 0, %s175
      %s177 = sphi 0, %s175
      %s178 = sphi 0, %s177
      %s192 = sphi 0, %s178
      %s196 = sphi 0, %s196
      %s198 = sphi 0, %s196
      %s199 = sphi 0, %s198
      %s213 = sphi 0, %s199
      %s219 = sphi 0, %s221
      %s222 = sphi 0, %s219
      %s223 = sphi 0, %s222
      %s239 = sphi 0, %s223
    $region4: #{mlp_forward.1} parent=1 // loop_header_branch
      %18 = sbr.rel (%p16) target = $region8
    $region5: #{mlp_forward.1} parent=1 // loop_body
      %s20 = ssub.s32 %s15, 1
      %s21 = ssub.s32 %s15, 2
      %s22 = sadd.s32 %s15, 1
      %s23 = ssub.s32 %s15, %s22
      %p24 = scmp.eq.s32.totalorder %s23, 0
      %s26 = sadd.s32 %s25, 1
      %s27 = scalar_select %p24, %s25, %s26
      %p30 = pneg %p24
      %p31 = scmp.eq.s32.totalorder %s15, 1
      %p32 = por %p30, %p31
      %p33 = scmp.ne.s32.totalorder %s25, %s28
      %p34 = scmp.eq.s32.totalorder %s15, 0
      %p35 = por %p33, %p34
      %p36 = scmp.ne.s32.totalorder %s25, %s28
      %p37 = scmp.eq.s32.totalorder %s20, 1
      %p38 = por %p36, %p37
      %p39 = scmp.ne.s32.totalorder %s28, %s29
      %p40 = scmp.eq.s32.totalorder %s20, 0
      %p41 = por %p39, %p40
      %p42 = scmp.ne.s32.totalorder %s28, %s29
      %p43 = scmp.eq.s32.totalorder %s21, 1
      %p44 = por %p42, %p43
      %p46 = scmp.ne.s32.totalorder %s29, %s45
      %p47 = scmp.eq.s32.totalorder %s21, 0
      %p48 = por %p46, %p47
      %s50 = sadd.s32 %s49, 1
      %p53 = scmp.eq.s32.totalorder %s15, 1
      %p54 = scmp.ne.s32.totalorder %s49, %s51
      %p55 = scmp.eq.s32.totalorder %s15, 0
      %p56 = por %p54, %p55
      %p57 = scmp.ne.s32.totalorder %s49, %s51
      %p58 = scmp.eq.s32.totalorder %s20, 1
      %p59 = por %p57, %p58
      %p60 = scmp.ne.s32.totalorder %s51, %s52
      %p61 = scmp.eq.s32.totalorder %s20, 0
      %p62 = por %p60, %p61
      %p63 = scmp.ne.s32.totalorder %s51, %s52
      %p64 = scmp.eq.s32.totalorder %s21, 1
      %p65 = por %p63, %p64
      %p67 = scmp.ne.s32.totalorder %s52, %s66
      %p68 = scmp.eq.s32.totalorder %s21, 0
      %p69 = por %p67, %p68
      %s71 = sadd.s32 %s70, 1
      %p74 = scmp.eq.s32.totalorder %s15, 1
      %p75 = scmp.ne.s32.totalorder %s70, %s72
      %p76 = scmp.eq.s32.totalorder %s15, 0
      %p77 = por %p75, %p76
      %p78 = scmp.ne.s32.totalorder %s70, %s72
      %p79 = scmp.eq.s32.totalorder %s20, 1
      %p80 = por %p78, %p79
      %p81 = scmp.ne.s32.totalorder %s72, %s73
      %p82 = scmp.eq.s32.totalorder %s20, 0
      %p83 = por %p81, %p82
      %p84 = scmp.ne.s32.totalorder %s72, %s73
      %p85 = scmp.eq.s32.totalorder %s21, 1
      %p86 = por %p84, %p85
      %p88 = scmp.ne.s32.totalorder %s73, %s87
      %p89 = scmp.eq.s32.totalorder %s21, 0
      %p90 = por %p88, %p89
      %s92 = sadd.s32 %s91, 1
      %p95 = scmp.eq.s32.totalorder %s15, 1
      %p96 = scmp.ne.s32.totalorder %s91, %s93
      %p97 = scmp.eq.s32.totalorder %s15, 0
      %p98 = por %p96, %p97
      %p99 = scmp.ne.s32.totalorder %s91, %s93
      %p100 = scmp.eq.s32.totalorder %s20, 1
      %p101 = por %p99, %p100
      %p102 = scmp.ne.s32.totalorder %s93, %s94
      %p103 = scmp.eq.s32.totalorder %s20, 0
      %p104 = por %p102, %p103
      %p105 = scmp.ne.s32.totalorder %s93, %s94
      %p106 = scmp.eq.s32.totalorder %s21, 1
      %p107 = por %p105, %p106
      %p109 = scmp.ne.s32.totalorder %s94, %s108
      %p110 = scmp.eq.s32.totalorder %s21, 0
      %p111 = por %p109, %p110
      %s113 = sadd.s32 %s112, 1
      %p116 = scmp.eq.s32.totalorder %s15, 1
      %p117 = scmp.ne.s32.totalorder %s112, %s114
      %p118 = scmp.eq.s32.totalorder %s15, 0
      %p119 = por %p117, %p118
      %p120 = scmp.ne.s32.totalorder %s112, %s114
      %p121 = scmp.eq.s32.totalorder %s20, 1
      %p122 = por %p120, %p121
      %p123 = scmp.ne.s32.totalorder %s114, %s115
      %p124 = scmp.eq.s32.totalorder %s20, 0
      %p125 = por %p123, %p124
      %p126 = scmp.ne.s32.totalorder %s114, %s115
      %p127 = scmp.eq.s32.totalorder %s21, 1
      %p128 = por %p126, %p127
      %p130 = scmp.ne.s32.totalorder %s115, %s129
      %p131 = scmp.eq.s32.totalorder %s21, 0
      %p132 = por %p130, %p131
      %s134 = sadd.s32 %s133, 1
      %p137 = scmp.eq.s32.totalorder %s15, 1
      %p138 = scmp.ne.s32.totalorder %s133, %s135
      %p139 = scmp.eq.s32.totalorder %s15, 0
      %p140 = por %p138, %p139
      %p141 = scmp.ne.s32.totalorder %s133, %s135
      %p142 = scmp.eq.s32.totalorder %s20, 1
      %p143 = por %p141, %p142
      %p144 = scmp.ne.s32.totalorder %s135, %s136
      %p145 = scmp.eq.s32.totalorder %s20, 0
      %p146 = por %p144, %p145
      %p147 = scmp.ne.s32.totalorder %s135, %s136
      %p148 = scmp.eq.s32.totalorder %s21, 1
      %p149 = por %p147, %p148
      %p151 = scmp.ne.s32.totalorder %s136, %s150
      %p152 = scmp.eq.s32.totalorder %s21, 0
      %p153 = por %p151, %p152
      %s155 = sadd.s32 %s154, 1
      %p158 = scmp.eq.s32.totalorder %s15, 1
      %p159 = scmp.ne.s32.totalorder %s154, %s156
      %p160 = scmp.eq.s32.totalorder %s15, 0
      %p161 = por %p159, %p160
      %p162 = scmp.ne.s32.totalorder %s154, %s156
      %p163 = scmp.eq.s32.totalorder %s20, 1
      %p164 = por %p162, %p163
      %p165 = scmp.ne.s32.totalorder %s156, %s157
      %p166 = scmp.eq.s32.totalorder %s20, 0
      %p167 = por %p165, %p166
      %p168 = scmp.ne.s32.totalorder %s156, %s157
      %p169 = scmp.eq.s32.totalorder %s21, 1
      %p170 = por %p168, %p169
      %p172 = scmp.ne.s32.totalorder %s157, %s171
      %p173 = scmp.eq.s32.totalorder %s21, 0
      %p174 = por %p172, %p173
      %s176 = sadd.s32 %s175, 1
      %p179 = scmp.eq.s32.totalorder %s15, 1
      %p180 = scmp.ne.s32.totalorder %s175, %s177
      %p181 = scmp.eq.s32.totalorder %s15, 0
      %p182 = por %p180, %p181
      %p183 = scmp.ne.s32.totalorder %s175, %s177
      %p184 = scmp.eq.s32.totalorder %s20, 1
      %p185 = por %p183, %p184
      %p186 = scmp.ne.s32.totalorder %s177, %s178
      %p187 = scmp.eq.s32.totalorder %s20, 0
      %p188 = por %p186, %p187
      %p189 = scmp.ne.s32.totalorder %s177, %s178
      %p190 = scmp.eq.s32.totalorder %s21, 1
      %p191 = por %p189, %p190
      %p193 = scmp.ne.s32.totalorder %s178, %s192
      %p194 = scmp.eq.s32.totalorder %s21, 0
      %p195 = por %p193, %p194
      %s197 = sadd.s32 %s196, 1
      %p200 = scmp.eq.s32.totalorder %s15, 1
      %p201 = scmp.ne.s32.totalorder %s196, %s198
      %p202 = scmp.eq.s32.totalorder %s15, 0
      %p203 = por %p201, %p202
      %p204 = scmp.ne.s32.totalorder %s196, %s198
      %p205 = scmp.eq.s32.totalorder %s20, 1
      %p206 = por %p204, %p205
      %p207 = scmp.ne.s32.totalorder %s198, %s199
      %p208 = scmp.eq.s32.totalorder %s20, 0
      %p209 = por %p207, %p208
      %p210 = scmp.ne.s32.totalorder %s198, %s199
      %p211 = scmp.eq.s32.totalorder %s21, 1
      %p212 = por %p210, %p211
      %p214 = scmp.ne.s32.totalorder %s199, %s213
      %p215 = scmp.eq.s32.totalorder %s21, 0
      %p216 = por %p214, %p215
      %s217 = ssub.s32 %s15, %s22
      %p218 = scmp.eq.s32.totalorder %s217, 0
      %s220 = sadd.s32 %s219, 1
      %s221 = scalar_select %p218, %s219, %s220
      %p224 = pneg %p218
      %p225 = scmp.eq.s32.totalorder %s15, 1
      %p226 = por %p224, %p225
      %p227 = scmp.ne.s32.totalorder %s219, %s222
      %p228 = scmp.eq.s32.totalorder %s15, 0
      %p229 = por %p227, %p228
      %p230 = scmp.ne.s32.totalorder %s219, %s222
      %p231 = scmp.eq.s32.totalorder %s20, 1
      %p232 = por %p230, %p231
      %p233 = scmp.ne.s32.totalorder %s222, %s223
      %p234 = scmp.eq.s32.totalorder %s20, 0
      %p235 = por %p233, %p234
      %p236 = scmp.ne.s32.totalorder %s222, %s223
      %p237 = scmp.eq.s32.totalorder %s21, 1
      %p238 = por %p236, %p237
      %p240 = scmp.ne.s32.totalorder %s223, %s239
      %p241 = scmp.eq.s32.totalorder %s21, 0
      %p242 = por %p240, %p241
      %p243 = scmp.le.s32.totalorder 1, %s15
      %p244 = scmp.lt.s32.totalorder %s15, 3
      %p245 = pnand %p243, %p244
      %p246 = pneg %p245
      // Predicated region
      $region9: #{mlp_forward.1} parent=5 // pred_check
        _
      $region10: #{mlp_forward.1} parent=5 // pred_check_branch
        %248 = sbr.rel (%p245) target = $region12
      $region11: #{mlp_forward.1} parent=5 // pred_region
        %s249 = ssub.s32 %s15, 1
        // Predicated region
        $region13: #{mlp_forward.1} parent=11 // pred_check
          %p250 = pneg %p62
        $region14: #{mlp_forward.1} parent=11 // pred_check_branch
          %252 = sbr.rel (%p250) target = $region16
        $region15: #{mlp_forward.1} parent=11 // pred_region
          _
        $region16: #{mlp_forward.1} parent=11 // pred_fallthru
          _
        // Predicated region
        $region17: #{mlp_forward.1} parent=11 // pred_check
          %p253 = pneg %p83
        $region18: #{mlp_forward.1} parent=11 // pred_check_branch
          %255 = sbr.rel (%p253) target = $region20
        $region19: #{mlp_forward.1} parent=11 // pred_region
          _
        $region20: #{mlp_forward.1} parent=11 // pred_fallthru
          _
        // Predicated region
        $region21: #{mlp_forward.1} parent=11 // pred_check
          %p256 = pneg %p104
        $region22: #{mlp_forward.1} parent=11 // pred_check_branch
          %258 = sbr.rel (%p256) target = $region24
        $region23: #{mlp_forward.1} parent=11 // pred_region
          _
        $region24: #{mlp_forward.1} parent=11 // pred_fallthru
          _
        // Predicated region
        $region25: #{mlp_forward.1} parent=11 // pred_check
          %p259 = pneg %p125
        $region26: #{mlp_forward.1} parent=11 // pred_check_branch
          %261 = sbr.rel (%p259) target = $region28
        $region27: #{mlp_forward.1} parent=11 // pred_region
          _
        $region28: #{mlp_forward.1} parent=11 // pred_fallthru
          _
        // Predicated region
        $region29: #{mlp_forward.1} parent=11 // pred_check
          %p262 = pneg %p146
        $region30: #{mlp_forward.1} parent=11 // pred_check_branch
          %264 = sbr.rel (%p262) target = $region32
        $region31: #{mlp_forward.1} parent=11 // pred_region
          _
        $region32: #{mlp_forward.1} parent=11 // pred_fallthru
          _
        // Predicated region
        $region33: #{mlp_forward.1} parent=11 // pred_check
          %p265 = pneg %p167
        $region34: #{mlp_forward.1} parent=11 // pred_check_branch
          %267 = sbr.rel (%p265) target = $region36
        $region35: #{mlp_forward.1} parent=11 // pred_region
          _
        $region36: #{mlp_forward.1} parent=11 // pred_fallthru
          _
        // Predicated region
        $region37: #{mlp_forward.1} parent=11 // pred_check
          %p268 = pneg %p188
        $region38: #{mlp_forward.1} parent=11 // pred_check_branch
          %270 = sbr.rel (%p268) target = $region40
        $region39: #{mlp_forward.1} parent=11 // pred_region
          _
        $region40: #{mlp_forward.1} parent=11 // pred_fallthru
          _
        // Predicated region
        $region41: #{mlp_forward.1} parent=11 // pred_check
          %p271 = pneg %p209
        $region42: #{mlp_forward.1} parent=11 // pred_check_branch
          %273 = sbr.rel (%p271) target = $region44
        $region43: #{mlp_forward.1} parent=11 // pred_region
          _
        $region44: #{mlp_forward.1} parent=11 // pred_fallthru
          _
      $region12: #{mlp_forward.1} parent=5 // pred_fallthru
        _
      %p274 = scmp.lt.s32.totalorder %s15, 2
      // Predicated region
      $region45: #{mlp_forward.1} parent=5 // pred_check
        %p275 = pneg %p274
      $region46: #{mlp_forward.1} parent=5 // pred_check_branch
        %277 = sbr.rel (%p275) target = $region48
      $region47: #{mlp_forward.1} parent=5 // pred_region
        // Predicated region
        $region49: #{mlp_forward.1} parent=47 // pred_check
          %p278 = pneg %p35
        $region50: #{mlp_forward.1} parent=47 // pred_check_branch
          %280 = sbr.rel (%p278) target = $region52
        $region51: #{mlp_forward.1} parent=47 // pred_region
          %s281 = smul.u32 63, %s15
          %s282 = ssub.s32 125, %s281
          %p283 = scmp.lt.s32.totalorder %s282, 63
          %s284 = scalar_select %p283, %s282, 63
          %s285 = smul.u32 128, %s284
          %s286 = smul.u32 %s285, 2
          %p287 = scmp.lt.s32.totalorder %s281, 124
          %s288 = scalar_select %p287, %s281, 124
          %s289 = smul.addr %s288, 2
          %s290 = smul.addr %s289, 8
          %s291 = scalar_lea.vmem %s0, %s290
          %s292 = smul.u32 63, %s15
          %s293 = ssub.s32 125, %s292
          %p294 = scmp.lt.s32.totalorder %s293, 63
          %s295 = scalar_select %p294, %s293, 63
          %s296 = smul.u32 128, %s295
          %s297 = smul.u32 %s296, 2
        $region52: #{mlp_forward.1} parent=47 // pred_fallthru
          _
      $region48: #{mlp_forward.1} parent=5 // pred_fallthru
        _
      %p298 = scmp.le.s32.totalorder 1, %s15
      %p299 = scmp.lt.s32.totalorder %s15, 3
      %p300 = pnand %p298, %p299
      %p301 = pneg %p300
      // Predicated region
      $region53: #{mlp_forward.1} parent=5 // pred_check
        _
      $region54: #{mlp_forward.1} parent=5 // pred_check_branch
        %303 = sbr.rel (%p300) target = $region56
      $region55: #{mlp_forward.1} parent=5 // pred_region
        %s304 = ssub.s32 %s15, 1
        %s305 = smul.u32 63, %s20
        %s306 = ssub.s32 125, %s305
        %p307 = scmp.lt.s32.totalorder %s306, 63
        %s308 = scalar_select %p307, %s306, 63
        %s309 = smul.u32 128, %s308
        %s310 = smul.u32 %s309, 2
        %p311 = scmp.lt.s32.totalorder %s305, 124
        %s312 = scalar_select %p311, %s305, 124
        %s313 = smul.addr %s312, 2
        %s314 = smul.addr %s313, 8
        %s315 = scalar_lea.vmem %s0, %s314
        %p316 = pneg %p41
        %p317 = pneg %p38
        %p318 = pneg %p62
        %p319 = pneg %p59
        %p320 = pneg %p83
        %p321 = pneg %p80
        %p322 = pneg %p104
        %p323 = pneg %p101
        %p324 = pneg %p125
        %p325 = pneg %p122
        %p326 = pneg %p146
        %p327 = pneg %p143
        %p328 = pneg %p167
        %p329 = pneg %p164
        %p330 = pneg %p188
        %p331 = pneg %p185
        %p332 = pneg %p209
        %p333 = pneg %p206
        %p334 = pneg %p235
        %p335 = pneg %p232
        %s336 = sand.u32 %s222, 1
        %s337 = sand.u32 %s222, 1
        %s338 = smul.addr %s337, 504
        %s339 = scalar_lea.vmem [#allocation2], %s338
        %s340 = smul.u32 63, %s20
        %s341 = ssub.s32 125, %s340
        %p342 = scmp.lt.s32.totalorder %s341, 63
        %s343 = scalar_select %p342, %s341, 63
        %s344 = smul.u32 128, %s343
        %s345 = smul.u32 %s344, 2
        %p346 = scmp.lt.s32.totalorder %s340, 124
        %s347 = scalar_select %p346, %s340, 124
        %s348 = smul.addr %s347, 2
        %s349 = smul.addr %s348, 8
        %s350 = scalar_lea.vmem %s0, %s349
        %s351 = smul.u32 63, %s20
        %s352 = ssub.s32 125, %s351
        %p353 = scmp.lt.s32.totalorder %s352, 63
        %s354 = scalar_select %p353, %s352, 63
        %s355 = smul.u32 128, %s354
        %s356 = smul.u32 %s355, 2
        %s357 = smul.u32 63, %s20
        %s358 = ssub.s32 125, %s357
        %p359 = scmp.lt.s32.totalorder %s358, 63
        %s360 = scalar_select %p359, %s358, 63
        %s361 = smul.u32 128, %s360
        %v363 = vld [vmem:[%s350] sm:$0xff]
        %v364 = vld [vmem:[%s350 + $0x8] sm:$0xff]
        %v365 = vld [vmem:[%s350 + $0x10] sm:$0xff]
        %v366 = vld [vmem:[%s350 + $0x18] sm:$0xff]
        %v367 = vld [vmem:[%s350 + $0x20] sm:$0xff]
        %v368 = vld [vmem:[%s350 + $0x28] sm:$0xff]
        %v369 = vld [vmem:[%s350 + $0x30] sm:$0xff]
        %v370 = vld [vmem:[%s350 + $0x38] sm:$0xff]
        %v371 = vld [vmem:[%s350 + $0x40] sm:$0xff]
        %v372 = vld [vmem:[%s350 + $0x48] sm:$0xff]
        %v373 = vld [vmem:[%s350 + $0x50] sm:$0xff]
        %v374 = vld [vmem:[%s350 + $0x58] sm:$0xff]
        %v375 = vld [vmem:[%s350 + $0x60] sm:$0xff]
        %v376 = vld [vmem:[%s350 + $0x68] sm:$0xff]
        %v377 = vld [vmem:[%s350 + $0x70] sm:$0xff]
        %v378 = vld [vmem:[%s350 + $0x78] sm:$0xff]
        %v379 = vld [vmem:[%s350 + $0x80] sm:$0xff]
        %v380 = vld [vmem:[%s350 + $0x88] sm:$0xff]
        %v381 = vld [vmem:[%s350 + $0x90] sm:$0xff]
        %v382 = vld [vmem:[%s350 + $0x98] sm:$0xff]
        %v383 = vld [vmem:[%s350 + $0xa0] sm:$0xff]
        %v384 = vld [vmem:[%s350 + $0xa8] sm:$0xff]
        %v385 = vld [vmem:[%s350 + $0xb0] sm:$0xff]
        %v386 = vld [vmem:[%s350 + $0xb8] sm:$0xff]
        %v387 = vld [vmem:[%s350 + $0xc0] sm:$0xff]
        %v388 = vld [vmem:[%s350 + $0xc8] sm:$0xff]
        %v389 = vld [vmem:[%s350 + $0xd0] sm:$0xff]
        %v390 = vld [vmem:[%s350 + $0xd8] sm:$0xff]
        %v391 = vld [vmem:[%s350 + $0xe0] sm:$0xff]
        %v392 = vld [vmem:[%s350 + $0xe8] sm:$0xff]
        %v393 = vld [vmem:[%s350 + $0xf0] sm:$0xff]
        %v394 = vld [vmem:[%s350 + $0xf8] sm:$0xff]
        %v395 = vld [vmem:[%s350 + $0x100] sm:$0xff]
        %v396 = vld [vmem:[%s350 + $0x108] sm:$0xff]
        %v397 = vld [vmem:[%s350 + $0x110] sm:$0xff]
        %v398 = vld [vmem:[%s350 + $0x118] sm:$0xff]
        %v399 = vld [vmem:[%s350 + $0x120] sm:$0xff]
        %v400 = vld [vmem:[%s350 + $0x128] sm:$0xff]
        %v401 = vld [vmem:[%s350 + $0x130] sm:$0xff]
        %v402 = vld [vmem:[%s350 + $0x138] sm:$0xff]
        %v403 = vld [vmem:[%s350 + $0x140] sm:$0xff]
        %v404 = vld [vmem:[%s350 + $0x148] sm:$0xff]
        %v405 = vld [vmem:[%s350 + $0x150] sm:$0xff]
        %v406 = vld [vmem:[%s350 + $0x158] sm:$0xff]
        %v407 = vld [vmem:[%s350 + $0x160] sm:$0xff]
        %v408 = vld [vmem:[%s350 + $0x168] sm:$0xff]
        %v409 = vld [vmem:[%s350 + $0x170] sm:$0xff]
        %v410 = vld [vmem:[%s350 + $0x178] sm:$0xff]
        %v411 = vld [vmem:[%s350 + $0x180] sm:$0xff]
        %v412 = vld [vmem:[%s350 + $0x188] sm:$0xff]
        %v413 = vld [vmem:[%s350 + $0x190] sm:$0xff]
        %v414 = vld [vmem:[%s350 + $0x198] sm:$0xff]
        %v415 = vld [vmem:[%s350 + $0x1a0] sm:$0xff]
        %v416 = vld [vmem:[%s350 + $0x1a8] sm:$0xff]
        %v417 = vld [vmem:[%s350 + $0x1b0] sm:$0xff]
        %v418 = vld [vmem:[%s350 + $0x1b8] sm:$0xff]
        %v419 = vld [vmem:[%s350 + $0x1c0] sm:$0xff]
        %v420 = vld [vmem:[%s350 + $0x1c8] sm:$0xff]
        %v421 = vld [vmem:[%s350 + $0x1d0] sm:$0xff]
        %v422 = vld [vmem:[%s350 + $0x1d8] sm:$0xff]
        %v423 = vld [vmem:[%s350 + $0x1e0] sm:$0xff]
        %v424 = vld [vmem:[%s350 + $0x1e8] sm:$0xff]
        %v425 = vld [vmem:[%s350 + $0x1f0] sm:$0xff]
        %v426 = vld [vmem:[%s350 + $0x1f8] sm:$0xff]
        %v427 = vld [vmem:[%s350 + $0x200] sm:$0xff]
        %v428 = vld [vmem:[%s350 + $0x208] sm:$0xff]
        %v429 = vld [vmem:[%s350 + $0x210] sm:$0xff]
        %v430 = vld [vmem:[%s350 + $0x218] sm:$0xff]
        %v431 = vld [vmem:[%s350 + $0x220] sm:$0xff]
        %v432 = vld [vmem:[%s350 + $0x228] sm:$0xff]
        %v433 = vld [vmem:[%s350 + $0x230] sm:$0xff]
        %v434 = vld [vmem:[%s350 + $0x238] sm:$0xff]
        %v435 = vld [vmem:[%s350 + $0x240] sm:$0xff]
        %v436 = vld [vmem:[%s350 + $0x248] sm:$0xff]
        %v437 = vld [vmem:[%s350 + $0x250] sm:$0xff]
        %v438 = vld [vmem:[%s350 + $0x258] sm:$0xff]
        %v439 = vld [vmem:[%s350 + $0x260] sm:$0xff]
        %v440 = vld [vmem:[%s350 + $0x268] sm:$0xff]
        %v441 = vld [vmem:[%s350 + $0x270] sm:$0xff]
        %v442 = vld [vmem:[%s350 + $0x278] sm:$0xff]
        %v443 = vld [vmem:[%s350 + $0x280] sm:$0xff]
        %v444 = vld [vmem:[%s350 + $0x288] sm:$0xff]
        %v445 = vld [vmem:[%s350 + $0x290] sm:$0xff]
        %v446 = vld [vmem:[%s350 + $0x298] sm:$0xff]
        %v447 = vld [vmem:[%s350 + $0x2a0] sm:$0xff]
        %v448 = vld [vmem:[%s350 + $0x2a8] sm:$0xff]
        %v449 = vld [vmem:[%s350 + $0x2b0] sm:$0xff]
        %v450 = vld [vmem:[%s350 + $0x2b8] sm:$0xff]
        %v451 = vld [vmem:[%s350 + $0x2c0] sm:$0xff]
        %v452 = vld [vmem:[%s350 + $0x2c8] sm:$0xff]
        %v453 = vld [vmem:[%s350 + $0x2d0] sm:$0xff]
        %v454 = vld [vmem:[%s350 + $0x2d8] sm:$0xff]
        %v455 = vld [vmem:[%s350 + $0x2e0] sm:$0xff]
        %v456 = vld [vmem:[%s350 + $0x2e8] sm:$0xff]
        %v457 = vld [vmem:[%s350 + $0x2f0] sm:$0xff]
        %v458 = vld [vmem:[%s350 + $0x2f8] sm:$0xff]
        %v459 = vld [vmem:[%s350 + $0x300] sm:$0xff]
        %v460 = vld [vmem:[%s350 + $0x308] sm:$0xff]
        %v461 = vld [vmem:[%s350 + $0x310] sm:$0xff]
        %v462 = vld [vmem:[%s350 + $0x318] sm:$0xff]
        %v463 = vld [vmem:[%s350 + $0x320] sm:$0xff]
        %v464 = vld [vmem:[%s350 + $0x328] sm:$0xff]
        %v465 = vld [vmem:[%s350 + $0x330] sm:$0xff]
        %v466 = vld [vmem:[%s350 + $0x338] sm:$0xff]
        %v467 = vld [vmem:[%s350 + $0x340] sm:$0xff]
        %v468 = vld [vmem:[%s350 + $0x348] sm:$0xff]
        %v469 = vld [vmem:[%s350 + $0x350] sm:$0xff]
        %v470 = vld [vmem:[%s350 + $0x358] sm:$0xff]
        %v471 = vld [vmem:[%s350 + $0x360] sm:$0xff]
        %v472 = vld [vmem:[%s350 + $0x368] sm:$0xff]
        %v473 = vld [vmem:[%s350 + $0x370] sm:$0xff]
        %v474 = vld [vmem:[%s350 + $0x378] sm:$0xff]
        %v475 = vld [vmem:[%s350 + $0x380] sm:$0xff]
        %v476 = vld [vmem:[%s350 + $0x388] sm:$0xff]
        %v477 = vld [vmem:[%s350 + $0x390] sm:$0xff]
        %v478 = vld [vmem:[%s350 + $0x398] sm:$0xff]
        %v479 = vld [vmem:[%s350 + $0x3a0] sm:$0xff]
        %v480 = vld [vmem:[%s350 + $0x3a8] sm:$0xff]
        %v481 = vld [vmem:[%s350 + $0x3b0] sm:$0xff]
        %v482 = vld [vmem:[%s350 + $0x3b8] sm:$0xff]
        %v483 = vld [vmem:[%s350 + $0x3c0] sm:$0xff]
        %v484 = vld [vmem:[%s350 + $0x3c8] sm:$0xff]
        %v485 = vld [vmem:[%s350 + $0x3d0] sm:$0xff]
        %v486 = vld [vmem:[%s350 + $0x3d8] sm:$0xff]
        %v487 = vld [vmem:[%s350 + $0x3e0] sm:$0xff]
        %v488 = vld [vmem:[%s350 + $0x3e8] sm:$0xff]
        %v489 = vpack.c.bf16 %v365, %v363
        %v490 = vpack.c.bf16 %v366, %v364
        %v491 = vpack.c.bf16 %v369, %v367
        %v492 = vpack.c.bf16 %v370, %v368
        %v493 = vpack.c.bf16 %v373, %v371
        %v494 = vpack.c.bf16 %v374, %v372
        %v495 = vpack.c.bf16 %v377, %v375
        %v496 = vpack.c.bf16 %v378, %v376
        %v497 = vpack.c.bf16 %v381, %v379
        %v498 = vpack.c.bf16 %v382, %v380
        %v499 = vpack.c.bf16 %v385, %v383
        %v500 = vpack.c.bf16 %v386, %v384
        %v501 = vpack.c.bf16 %v389, %v387
        %v502 = vpack.c.bf16 %v390, %v388
        %v503 = vpack.c.bf16 %v393, %v391
        %v504 = vpack.c.bf16 %v394, %v392
        %v505 = vpack.c.bf16 %v397, %v395
        %v506 = vpack.c.bf16 %v398, %v396
        %v507 = vpack.c.bf16 %v401, %v399
        %v508 = vpack.c.bf16 %v402, %v400
        %v509 = vpack.c.bf16 %v405, %v403
        %v510 = vpack.c.bf16 %v406, %v404
        %v511 = vpack.c.bf16 %v409, %v407
        %v512 = vpack.c.bf16 %v410, %v408
        %v513 = vpack.c.bf16 %v413, %v411
        %v514 = vpack.c.bf16 %v414, %v412
        %v515 = vpack.c.bf16 %v417, %v415
        %v516 = vpack.c.bf16 %v418, %v416
        %v517 = vpack.c.bf16 %v421, %v419
        %v518 = vpack.c.bf16 %v422, %v420
        %v519 = vpack.c.bf16 %v425, %v423
        %v520 = vpack.c.bf16 %v426, %v424
        %v521 = vpack.c.bf16 %v429, %v427
        %v522 = vpack.c.bf16 %v430, %v428
        %v523 = vpack.c.bf16 %v433, %v431
        %v524 = vpack.c.bf16 %v434, %v432
        %v525 = vpack.c.bf16 %v437, %v435
        %v526 = vpack.c.bf16 %v438, %v436
        %v527 = vpack.c.bf16 %v441, %v439
        %v528 = vpack.c.bf16 %v442, %v440
        %v529 = vpack.c.bf16 %v445, %v443
        %v530 = vpack.c.bf16 %v446, %v444
        %v531 = vpack.c.bf16 %v449, %v447
        %v532 = vpack.c.bf16 %v450, %v448
        %v533 = vpack.c.bf16 %v453, %v451
        %v534 = vpack.c.bf16 %v454, %v452
        %v535 = vpack.c.bf16 %v457, %v455
        %v536 = vpack.c.bf16 %v458, %v456
        %v537 = vpack.c.bf16 %v461, %v459
        %v538 = vpack.c.bf16 %v462, %v460
        %v539 = vpack.c.bf16 %v465, %v463
        %v540 = vpack.c.bf16 %v466, %v464
        %v541 = vpack.c.bf16 %v469, %v467
        %v542 = vpack.c.bf16 %v470, %v468
        %v543 = vpack.c.bf16 %v473, %v471
        %v544 = vpack.c.bf16 %v474, %v472
        %v545 = vpack.c.bf16 %v477, %v475
        %v546 = vpack.c.bf16 %v478, %v476
        %v547 = vpack.c.bf16 %v481, %v479
        %v548 = vpack.c.bf16 %v482, %v480
        %v549 = vpack.c.bf16 %v485, %v483
        %v550 = vpack.c.bf16 %v486, %v484
        %v551 = vpack.c.bf16 %v487, %v487
        %v552 = vpack.c.bf16 %v488, %v488
        %v553 = vld [vmem:[%s1] sm:$0xf]
        %v554 = vld [vmem:[%s1 + $0x4] sm:$0xf]
        %v555 = vld [vmem:[%s1 + $0x8] sm:$0xf]
        %v556 = vld [vmem:[%s1 + $0xc] sm:$0xf]
        %v557 = vld [vmem:[%s1 + $0x10] sm:$0xf]
        %v558 = vld [vmem:[%s1 + $0x14] sm:$0xf]
        %v559 = vld [vmem:[%s1 + $0x18] sm:$0xf]
        %v560 = vld [vmem:[%s1 + $0x1c] sm:$0xf]
        %v561 = vld [vmem:[%s1 + $0x20] sm:$0xf]
        %v562 = vld [vmem:[%s1 + $0x24] sm:$0xf]
        %v563 = vld [vmem:[%s1 + $0x28] sm:$0xf]
        %v564 = vld [vmem:[%s1 + $0x2c] sm:$0xf]
        %v565 = vld [vmem:[%s1 + $0x30] sm:$0xf]
        %v566 = vld [vmem:[%s1 + $0x34] sm:$0xf]
        %v567 = vld [vmem:[%s1 + $0x38] sm:$0xf]
        %v568 = vld [vmem:[%s1 + $0x3c] sm:$0xf]
        %v569 = vld [vmem:[%s1 + $0x40] sm:$0x1]
        %v570 = vld [vmem:[%s2] sm:$0x1]
        %v572 = vlaneseq
        %v573 = vshrl.u32 %v572, 7
        %v574 = vsub.s32 0, %v573
        %v575 = vrot.slane %v570, %v574
        %v594 = vunpack.c.l.b16 %v553
        %v595 = vunpack.c.l.b16 %v554
        %v596 = vunpack.c.l.b16 %v555
        %v597 = vunpack.c.l.b16 %v556
        %v598 = vunpack.c.l.b16 %v557
        %v599 = vunpack.c.l.b16 %v558
        %v600 = vunpack.c.l.b16 %v559
        %v601 = vunpack.c.l.b16 %v560
        %v602 = vunpack.c.l.b16 %v561
        %v603 = vunpack.c.l.b16 %v562
        %v604 = vunpack.c.l.b16 %v563
        %v605 = vunpack.c.l.b16 %v564
        %v606 = vunpack.c.l.b16 %v565
        %v607 = vunpack.c.l.b16 %v566
        %v608 = vunpack.c.l.b16 %v567
        %v609 = vunpack.c.l.b16 %v568
        %v610 = vunpack.c.l.b16 %v569
        %v611 = vpack.c.b16 %v595, %v594
        %v612 = vpack.c.b16 %v597, %v596
        %v613 = vpack.c.b16 %v599, %v598
        %v614 = vpack.c.b16 %v601, %v600
        %v615 = vpack.c.b16 %v603, %v602
        %v616 = vpack.c.b16 %v605, %v604
        %v617 = vpack.c.b16 %v607, %v606
        %v618 = vpack.c.b16 %v609, %v608
        %v619 = vpack.c.b16 %v610, %v610
        %vm628 = vcmask 15360
        %v630 = vsel %vm628, %v490, 0
        %v633 = vsel %vm628, %v492, 0
        %v636 = vsel %vm628, %v494, 0
        %v639 = vsel %vm628, %v496, 0
        %v642 = vsel %vm628, %v498, 0
        %v645 = vsel %vm628, %v500, 0
        %v648 = vsel %vm628, %v502, 0
        %v651 = vsel %vm628, %v504, 0
        %v654 = vsel %vm628, %v506, 0
        %v657 = vsel %vm628, %v508, 0
        %v660 = vsel %vm628, %v510, 0
        %v663 = vsel %vm628, %v512, 0
        %v666 = vsel %vm628, %v514, 0
        %v669 = vsel %vm628, %v516, 0
        %v672 = vsel %vm628, %v518, 0
        %v675 = vsel %vm628, %v520, 0
        %v678 = vsel %vm628, %v522, 0
        %v681 = vsel %vm628, %v524, 0
        %v684 = vsel %vm628, %v526, 0
        %v687 = vsel %vm628, %v528, 0
        %v690 = vsel %vm628, %v530, 0
        %v693 = vsel %vm628, %v532, 0
        %v696 = vsel %vm628, %v534, 0
        %v699 = vsel %vm628, %v536, 0
        %v702 = vsel %vm628, %v538, 0
        %v705 = vsel %vm628, %v540, 0
        %v708 = vsel %vm628, %v542, 0
        %v711 = vsel %vm628, %v544, 0
        %v714 = vsel %vm628, %v546, 0
        %v717 = vsel %vm628, %v548, 0
        %v720 = vsel %vm628, %v550, 0
        %v723 = vsel %vm628, %v552, 0
        %vm725 = vcmask 1040384
        %v727 = vsel %vm725, %v619, 0
        %729 = vmatprep.subr.bf16.mxu0 0
        %730 = vmatpush1.bf16.msra.mxu0 %v611
        %731 = vmatprep.subr.bf16.mxu0 0
        %732 = vmatpush1.bf16.msra.mxu0 %v612
        %733 = vmatprep.subr.bf16.mxu0 0
        %734 = vmatpush1.bf16.msra.mxu0 %v613
        %735 = vmatprep.subr.bf16.mxu0 0
        %736 = vmatpush1.bf16.msra.mxu0 %v614
        %737 = vmatprep.subr.bf16.mxu0 0
        %738 = vmatpush1.bf16.msra.mxu0 %v615
        %739 = vmatprep.subr.bf16.mxu0 0
        %740 = vmatpush1.bf16.msra.mxu0 %v616
        %741 = vmatprep.subr.bf16.mxu0 0
        %742 = vmatpush1.bf16.msra.mxu0 %v617
        %743 = vmatprep.subr.bf16.mxu0 0
        %744 = vmatpush1.bf16.msra.mxu0 %v618
        %745 = vmatprep.subr.bf16.mxu0 0
        %746 = vmatpush1.bf16.msra.mxu0 %v727
        %747 = vmatprep.subr.bf16.mxu0 0
        %748 = vmatpush1.bf16.msra.mxu0 0
        %749 = vmatprep.subr.bf16.mxu0 0
        %750 = vmatpush1.bf16.msra.mxu0 0
        %751 = vmatprep.subr.bf16.mxu0 0
        %752 = vmatpush1.bf16.msra.mxu0 0
        %753 = vmatprep.subr.bf16.mxu0 0
        %754 = vmatpush1.bf16.msra.mxu0 0
        %755 = vmatprep.subr.bf16.mxu0 0
        %756 = vmatpush1.bf16.msra.mxu0 0
        %757 = vmatprep.subr.bf16.mxu0 0
        %758 = vmatpush1.bf16.msra.mxu0 0
        %759 = vmatprep.subr.bf16.mxu0 0
        %760 = vmatpush1.bf16.msra.mxu0 0
        %761 = vmatprep.mubr.bf16.mxu0 %v630
        %762 = vmatmul.mubr.bf16.gmra.mrb[0].mxu0 %v489
        %v763 = vpop.f32.mrb[0].mxu0
        %v764 = vadd.f32 %v575, %v763
        %v765 = vpop.f32.mrb[0].mxu0
        %v766 = vpop.f32.mrb[0].mxu0
        %v767 = vadd.f32 %v575, %v766
        %v768 = vpop.f32.mrb[0].mxu0
        %769 = vmatprep.mubr.bf16.mxu0 %v633
        %770 = vmatmul.mubr.bf16.gmra.mrb[0].mxu0 %v491
        %v771 = vpop.f32.mrb[0].mxu0
        %v772 = vadd.f32 %v575, %v771
        %v773 = vpop.f32.mrb[0].mxu0
        %v774 = vpop.f32.mrb[0].mxu0
        %v775 = vadd.f32 %v575, %v774
        %v776 = vpop.f32.mrb[0].mxu0
        %777 = vmatprep.mubr.bf16.mxu0 %v636
        %778 = vmatmul.mubr.bf16.gmra.mrb[0].mxu0 %v493
        %v779 = vpop.f32.mrb[0].mxu0
        %v780 = vadd.f32 %v575, %v779
        %v781 = vpop.f32.mrb[0].mxu0
        %v782 = vpop.f32.mrb[0].mxu0
        %v783 = vadd.f32 %v575, %v782
        %v784 = vpop.f32.mrb[0].mxu0
        %785 = vmatprep.mubr.bf16.mxu0 %v639
        %786 = vmatmul.mubr.bf16.gmra.mrb[0].mxu0 %v495
        %v787 = vpop.f32.mrb[0].mxu0
        %v788 = vadd.f32 %v575, %v787
        %v789 = vpop.f32.mrb[0].mxu0
        %v790 = vpop.f32.mrb[0].mxu0
        %v791 = vadd.f32 %v575, %v790
        %v792 = vpop.f32.mrb[0].mxu0
        %793 = vmatprep.mubr.bf16.mxu0 %v642
        %794 = vmatmul.mubr.bf16.gmra.mrb[0].mxu0 %v497
        %v795 = vpop.f32.mrb[0].mxu0
        %v796 = vadd.f32 %v575, %v795
        %v797 = vpop.f32.mrb[0].mxu0
        %v798 = vpop.f32.mrb[0].mxu0
        %v799 = vadd.f32 %v575, %v798
        %v800 = vpop.f32.mrb[0].mxu0
        %801 = vmatprep.mubr.bf16.mxu0 %v645
        %802 = vmatmul.mubr.bf16.gmra.mrb[0].mxu0 %v499
        %v803 = vpop.f32.mrb[0].mxu0
        %v804 = vadd.f32 %v575, %v803
        %v805 = vpop.f32.mrb[0].mxu0
        %v806 = vpop.f32.mrb[0].mxu0
        %v807 = vadd.f32 %v575, %v806
        %v808 = vpop.f32.mrb[0].mxu0
        %809 = vmatprep.mubr.bf16.mxu0 %v648
        %810 = vmatmul.mubr.bf16.gmra.mrb[0].mxu0 %v501
        %v811 = vpop.f32.mrb[0].mxu0
        %v812 = vadd.f32 %v575, %v811
        %v813 = vpop.f32.mrb[0].mxu0
        %v814 = vpop.f32.mrb[0].mxu0
        %v815 = vadd.f32 %v575, %v814
        %v816 = vpop.f32.mrb[0].mxu0
        %817 = vmatprep.mubr.bf16.mxu0 %v651
        %818 = vmatmul.mubr.bf16.gmra.mrb[0].mxu0 %v503
        %v819 = vpop.f32.mrb[0].mxu0
        %v820 = vadd.f32 %v575, %v819
        %v821 = vpop.f32.mrb[0].mxu0
        %v822 = vpop.f32.mrb[0].mxu0
        %v823 = vadd.f32 %v575, %v822
        %v824 = vpop.f32.mrb[0].mxu0
        %825 = vmatprep.mubr.bf16.mxu0 %v654
        %826 = vmatmul.mubr.bf16.gmra.mrb[0].mxu0 %v505
        %v827 = vpop.f32.mrb[0].mxu0
        %v828 = vadd.f32 %v575, %v827
        %v829 = vpop.f32.mrb[0].mxu0
        %v830 = vpop.f32.mrb[0].mxu0
        %v831 = vadd.f32 %v575, %v830
        %v832 = vpop.f32.mrb[0].mxu0
        %833 = vmatprep.mubr.bf16.mxu0 %v657
        %834 = vmatmul.mubr.bf16.gmra.mrb[0].mxu0 %v507
        %v835 = vpop.f32.mrb[0].mxu0
        %v836 = vadd.f32 %v575, %v835
        %v837 = vpop.f32.mrb[0].mxu0
        %v838 = vpop.f32.mrb[0].mxu0
        %v839 = vadd.f32 %v575, %v838
        %v840 = vpop.f32.mrb[0].mxu0
        %841 = vmatprep.mubr.bf16.mxu0 %v660
        %842 = vmatmul.mubr.bf16.gmra.mrb[0].mxu0 %v509
        %v843 = vpop.f32.mrb[0].mxu0
        %v844 = vadd.f32 %v575, %v843
        %v845 = vpop.f32.mrb[0].mxu0
        %v846 = vpop.f32.mrb[0].mxu0
        %v847 = vadd.f32 %v575, %v846
        %v848 = vpop.f32.mrb[0].mxu0
        %849 = vmatprep.mubr.bf16.mxu0 %v663
        %850 = vmatmul.mubr.bf16.gmra.mrb[0].mxu0 %v511
        %v851 = vpop.f32.mrb[0].mxu0
        %v852 = vadd.f32 %v575, %v851
        %v853 = vpop.f32.mrb[0].mxu0
        %v854 = vpop.f32.mrb[0].mxu0
        %v855 = vadd.f32 %v575, %v854
        %v856 = vpop.f32.mrb[0].mxu0
        %857 = vmatprep.mubr.bf16.mxu0 %v666
        %858 = vmatmul.mubr.bf16.gmra.mrb[0].mxu0 %v513
        %v859 = vpop.f32.mrb[0].mxu0
        %v860 = vadd.f32 %v575, %v859
        %v861 = vpop.f32.mrb[0].mxu0
        %v862 = vpop.f32.mrb[0].mxu0
        %v863 = vadd.f32 %v575, %v862
        %v864 = vpop.f32.mrb[0].mxu0
        %865 = vmatprep.mubr.bf16.mxu0 %v669
        %866 = vmatmul.mubr.bf16.gmra.mrb[0].mxu0 %v515
        %v867 = vpop.f32.mrb[0].mxu0
        %v868 = vadd.f32 %v575, %v867
        %v869 = vpop.f32.mrb[0].mxu0
        %v870 = vpop.f32.mrb[0].mxu0
        %v871 = vadd.f32 %v575, %v870
        %v872 = vpop.f32.mrb[0].mxu0
        %873 = vmatprep.mubr.bf16.mxu0 %v672
        %874 = vmatmul.mubr.bf16.gmra.mrb[0].mxu0 %v517
        %v875 = vpop.f32.mrb[0].mxu0
        %v876 = vadd.f32 %v575, %v875
        %v877 = vpop.f32.mrb[0].mxu0
        %v878 = vpop.f32.mrb[0].mxu0
        %v879 = vadd.f32 %v575, %v878
        %v880 = vpop.f32.mrb[0].mxu0
        %881 = vmatprep.mubr.bf16.mxu0 %v675
        %882 = vmatmul.mubr.bf16.gmra.mrb[0].mxu0 %v519
        %v883 = vpop.f32.mrb[0].mxu0
        %v884 = vadd.f32 %v575, %v883
        %v885 = vpop.f32.mrb[0].mxu0
        %v886 = vpop.f32.mrb[0].mxu0
        %v887 = vadd.f32 %v575, %v886
        %v888 = vpop.f32.mrb[0].mxu0
        %889 = vmatprep.mubr.bf16.mxu0 %v678
        %890 = vmatmul.mubr.bf16.gmra.mrb[0].mxu0 %v521
        %v891 = vpop.f32.mrb[0].mxu0
        %v892 = vadd.f32 %v575, %v891
        %v893 = vpop.f32.mrb[0].mxu0
        %v894 = vpop.f32.mrb[0].mxu0
        %v895 = vadd.f32 %v575, %v894
        %v896 = vpop.f32.mrb[0].mxu0
        %897 = vmatprep.mubr.bf16.mxu0 %v681
        %898 = vmatmul.mubr.bf16.gmra.mrb[0].mxu0 %v523
        %v899 = vpop.f32.mrb[0].mxu0
        %v900 = vadd.f32 %v575, %v899
        %v901 = vpop.f32.mrb[0].mxu0
        %v902 = vpop.f32.mrb[0].mxu0
        %v903 = vadd.f32 %v575, %v902
        %v904 = vpop.f32.mrb[0].mxu0
        %905 = vmatprep.mubr.bf16.mxu0 %v684
        %906 = vmatmul.mubr.bf16.gmra.mrb[0].mxu0 %v525
        %v907 = vpop.f32.mrb[0].mxu0
        %v908 = vadd.f32 %v575, %v907
        %v909 = vpop.f32.mrb[0].mxu0
        %v910 = vpop.f32.mrb[0].mxu0
        %v911 = vadd.f32 %v575, %v910
        %v912 = vpop.f32.mrb[0].mxu0
        %913 = vmatprep.mubr.bf16.mxu0 %v687
        %914 = vmatmul.mubr.bf16.gmra.mrb[0].mxu0 %v527
        %v915 = vpop.f32.mrb[0].mxu0
        %v916 = vadd.f32 %v575, %v915
        %v917 = vpop.f32.mrb[0].mxu0
        %v918 = vpop.f32.mrb[0].mxu0
        %v919 = vadd.f32 %v575, %v918
        %v920 = vpop.f32.mrb[0].mxu0
        %921 = vmatprep.mubr.bf16.mxu0 %v690
        %922 = vmatmul.mubr.bf16.gmra.mrb[0].mxu0 %v529
        %v923 = vpop.f32.mrb[0].mxu0
        %v924 = vadd.f32 %v575, %v923
        %v925 = vpop.f32.mrb[0].mxu0
        %v926 = vpop.f32.mrb[0].mxu0
        %v927 = vadd.f32 %v575, %v926
        %v928 = vpop.f32.mrb[0].mxu0
        %929 = vmatprep.mubr.bf16.mxu0 %v693
        %930 = vmatmul.mubr.bf16.gmra.mrb[0].mxu0 %v531
        %v931 = vpop.f32.mrb[0].mxu0
        %v932 = vadd.f32 %v575, %v931
        %v933 = vpop.f32.mrb[0].mxu0
        %v934 = vpop.f32.mrb[0].mxu0
        %v935 = vadd.f32 %v575, %v934
        %v936 = vpop.f32.mrb[0].mxu0
        %937 = vmatprep.mubr.bf16.mxu0 %v696
        %938 = vmatmul.mubr.bf16.gmra.mrb[0].mxu0 %v533
        %v939 = vpop.f32.mrb[0].mxu0
        %v940 = vadd.f32 %v575, %v939
        %v941 = vpop.f32.mrb[0].mxu0
        %v942 = vpop.f32.mrb[0].mxu0
        %v943 = vadd.f32 %v575, %v942
        %v944 = vpop.f32.mrb[0].mxu0
        %945 = vmatprep.mubr.bf16.mxu0 %v699
        %946 = vmatmul.mubr.bf16.gmra.mrb[0].mxu0 %v535
        %v947 = vpop.f32.mrb[0].mxu0
        %v948 = vadd.f32 %v575, %v947
        %v949 = vpop.f32.mrb[0].mxu0
        %v950 = vpop.f32.mrb[0].mxu0
        %v951 = vadd.f32 %v575, %v950
        %v952 = vpop.f32.mrb[0].mxu0
        %953 = vmatprep.mubr.bf16.mxu0 %v702
        %954 = vmatmul.mubr.bf16.gmra.mrb[0].mxu0 %v537
        %v955 = vpop.f32.mrb[0].mxu0
        %v956 = vadd.f32 %v575, %v955
        %v957 = vpop.f32.mrb[0].mxu0
        %v958 = vpop.f32.mrb[0].mxu0
        %v959 = vadd.f32 %v575, %v958
        %v960 = vpop.f32.mrb[0].mxu0
        %961 = vmatprep.mubr.bf16.mxu0 %v705
        %962 = vmatmul.mubr.bf16.gmra.mrb[0].mxu0 %v539
        %v963 = vpop.f32.mrb[0].mxu0
        %v964 = vadd.f32 %v575, %v963
        %v965 = vpop.f32.mrb[0].mxu0
        %v966 = vpop.f32.mrb[0].mxu0
        %v967 = vadd.f32 %v575, %v966
        %v968 = vpop.f32.mrb[0].mxu0
        %969 = vmatprep.mubr.bf16.mxu0 %v708
        %970 = vmatmul.mubr.bf16.gmra.mrb[0].mxu0 %v541
        %v971 = vpop.f32.mrb[0].mxu0
        %v972 = vadd.f32 %v575, %v971
        %v973 = vpop.f32.mrb[0].mxu0
        %v974 = vpop.f32.mrb[0].mxu0
        %v975 = vadd.f32 %v575, %v974
        %v976 = vpop.f32.mrb[0].mxu0
        %977 = vmatprep.mubr.bf16.mxu0 %v711
        %978 = vmatmul.mubr.bf16.gmra.mrb[0].mxu0 %v543
        %v979 = vpop.f32.mrb[0].mxu0
        %v980 = vadd.f32 %v575, %v979
        %v981 = vpop.f32.mrb[0].mxu0
        %v982 = vpop.f32.mrb[0].mxu0
        %v983 = vadd.f32 %v575, %v982
        %v984 = vpop.f32.mrb[0].mxu0
        %985 = vmatprep.mubr.bf16.mxu0 %v714
        %986 = vmatmul.mubr.bf16.gmra.mrb[0].mxu0 %v545
        %v987 = vpop.f32.mrb[0].mxu0
        %v988 = vadd.f32 %v575, %v987
        %v989 = vpop.f32.mrb[0].mxu0
        %v990 = vpop.f32.mrb[0].mxu0
        %v991 = vadd.f32 %v575, %v990
        %v992 = vpop.f32.mrb[0].mxu0
        %993 = vmatprep.mubr.bf16.mxu0 %v717
        %994 = vmatmul.mubr.bf16.gmra.mrb[0].mxu0 %v547
        %v995 = vpop.f32.mrb[0].mxu0
        %v996 = vadd.f32 %v575, %v995
        %v997 = vpop.f32.mrb[0].mxu0
        %v998 = vpop.f32.mrb[0].mxu0
        %v999 = vadd.f32 %v575, %v998
        %v1000 = vpop.f32.mrb[0].mxu0
        %1001 = vmatprep.mubr.bf16.mxu0 %v720
        %1002 = vmatmul.mubr.bf16.gmra.mrb[0].mxu0 %v549
        %v1003 = vpop.f32.mrb[0].mxu0
        %v1004 = vadd.f32 %v575, %v1003
        %v1005 = vpop.f32.mrb[0].mxu0
        %v1006 = vpop.f32.mrb[0].mxu0
        %v1007 = vadd.f32 %v575, %v1006
        %v1008 = vpop.f32.mrb[0].mxu0
        %1009 = vmatprep.mubr.bf16.mxu0 %v723
        %1010 = vmatmul.mubr.bf16.gmra.mrb[0].mxu0 %v551
        %v1011 = vpop.f32.mrb[0].mxu0
        %v1012 = vadd.f32 %v575, %v1011
        %v1013 = vpop.f32.mrb[0].mxu0
        %v1014 = vpop.f32.mrb[0].mxu0
        %v1015 = vpop.f32.mrb[0].mxu0
        %1016 = vdwg.mxu0
        %v1017 = vmax.f32 %v764, 0.0
        %v1018 = vmax.f32 %v767, 0.0
        %v1019 = vmax.f32 %v772, 0.0
        %v1020 = vmax.f32 %v775, 0.0
        %v1021 = vmax.f32 %v780, 0.0
        %v1022 = vmax.f32 %v783, 0.0
        %v1023 = vmax.f32 %v788, 0.0
        %v1024 = vmax.f32 %v791, 0.0
        %v1025 = vmax.f32 %v796, 0.0
        %v1026 = vmax.f32 %v799, 0.0
        %v1027 = vmax.f32 %v804, 0.0
        %v1028 = vmax.f32 %v807, 0.0
        %v1029 = vmax.f32 %v812, 0.0
        %v1030 = vmax.f32 %v815, 0.0
        %v1031 = vmax.f32 %v820, 0.0
        %v1032 = vmax.f32 %v823, 0.0
        %v1033 = vmax.f32 %v828, 0.0
        %v1034 = vmax.f32 %v831, 0.0
        %v1035 = vmax.f32 %v836, 0.0
        %v1036 = vmax.f32 %v839, 0.0
        %v1037 = vmax.f32 %v844, 0.0
        %v1038 = vmax.f32 %v847, 0.0
        %v1039 = vmax.f32 %v852, 0.0
        %v1040 = vmax.f32 %v855, 0.0
        %v1041 = vmax.f32 %v860, 0.0
        %v1042 = vmax.f32 %v863, 0.0
        %v1043 = vmax.f32 %v868, 0.0
        %v1044 = vmax.f32 %v871, 0.0
        %v1045 = vmax.f32 %v876, 0.0
        %v1046 = vmax.f32 %v879, 0.0
        %v1047 = vmax.f32 %v884, 0.0
        %v1048 = vmax.f32 %v887, 0.0
        %v1049 = vmax.f32 %v892, 0.0
        %v1050 = vmax.f32 %v895, 0.0
        %v1051 = vmax.f32 %v900, 0.0
        %v1052 = vmax.f32 %v903, 0.0
        %v1053 = vmax.f32 %v908, 0.0
        %v1054 = vmax.f32 %v911, 0.0
        %v1055 = vmax.f32 %v916, 0.0
        %v1056 = vmax.f32 %v919, 0.0
        %v1057 = vmax.f32 %v924, 0.0
        %v1058 = vmax.f32 %v927, 0.0
        %v1059 = vmax.f32 %v932, 0.0
        %v1060 = vmax.f32 %v935, 0.0
        %v1061 = vmax.f32 %v940, 0.0
        %v1062 = vmax.f32 %v943, 0.0
        %v1063 = vmax.f32 %v948, 0.0
        %v1064 = vmax.f32 %v951, 0.0
        %v1065 = vmax.f32 %v956, 0.0
        %v1066 = vmax.f32 %v959, 0.0
        %v1067 = vmax.f32 %v964, 0.0
        %v1068 = vmax.f32 %v967, 0.0
        %v1069 = vmax.f32 %v972, 0.0
        %v1070 = vmax.f32 %v975, 0.0
        %v1071 = vmax.f32 %v980, 0.0
        %v1072 = vmax.f32 %v983, 0.0
        %v1073 = vmax.f32 %v988, 0.0
        %v1074 = vmax.f32 %v991, 0.0
        %v1075 = vmax.f32 %v996, 0.0
        %v1076 = vmax.f32 %v999, 0.0
        %v1077 = vmax.f32 %v1004, 0.0
        %v1078 = vmax.f32 %v1007, 0.0
        %v1079 = vmax.f32 %v1012, 0.0
        %v1080 = vpack.c.bf16 %v1018, %v1017
        %v1081 = vpack.c.bf16 %v1020, %v1019
        %v1082 = vpack.c.bf16 %v1022, %v1021
        %v1083 = vpack.c.bf16 %v1024, %v1023
        %v1084 = vpack.c.bf16 %v1026, %v1025
        %v1085 = vpack.c.bf16 %v1028, %v1027
        %v1086 = vpack.c.bf16 %v1030, %v1029
        %v1087 = vpack.c.bf16 %v1032, %v1031
        %v1088 = vpack.c.bf16 %v1034, %v1033
        %v1089 = vpack.c.bf16 %v1036, %v1035
        %v1090 = vpack.c.bf16 %v1038, %v1037
        %v1091 = vpack.c.bf16 %v1040, %v1039
        %v1092 = vpack.c.bf16 %v1042, %v1041
        %v1093 = vpack.c.bf16 %v1044, %v1043
        %v1094 = vpack.c.bf16 %v1046, %v1045
        %v1095 = vpack.c.bf16 %v1048, %v1047
        %v1096 = vpack.c.bf16 %v1050, %v1049
        %v1097 = vpack.c.bf16 %v1052, %v1051
        %v1098 = vpack.c.bf16 %v1054, %v1053
        %v1099 = vpack.c.bf16 %v1056, %v1055
        %v1100 = vpack.c.bf16 %v1058, %v1057
        %v1101 = vpack.c.bf16 %v1060, %v1059
        %v1102 = vpack.c.bf16 %v1062, %v1061
        %v1103 = vpack.c.bf16 %v1064, %v1063
        %v1104 = vpack.c.bf16 %v1066, %v1065
        %v1105 = vpack.c.bf16 %v1068, %v1067
        %v1106 = vpack.c.bf16 %v1070, %v1069
        %v1107 = vpack.c.bf16 %v1072, %v1071
        %v1108 = vpack.c.bf16 %v1074, %v1073
        %v1109 = vpack.c.bf16 %v1076, %v1075
        %v1110 = vpack.c.bf16 %v1078, %v1077
        %v1111 = vpack.c.bf16 %v1079, %v1079
        %v1112 = vld [vmem:[%s3] sm:$0xf]
        %v1113 = vld [vmem:[%s3 + $0x4] sm:$0xf]
        %v1114 = vld [vmem:[%s3 + $0x8] sm:$0xf]
        %v1115 = vld [vmem:[%s3 + $0xc] sm:$0xf]
        %v1116 = vld [vmem:[%s3 + $0x10] sm:$0xf]
        %v1117 = vld [vmem:[%s3 + $0x14] sm:$0xf]
        %v1118 = vld [vmem:[%s3 + $0x18] sm:$0xf]
        %v1119 = vld [vmem:[%s3 + $0x1c] sm:$0xf]
        %v1120 = vld [vmem:[%s3 + $0x20] sm:$0xf]
        %v1121 = vld [vmem:[%s3 + $0x24] sm:$0xf]
        %v1122 = vld [vmem:[%s3 + $0x28] sm:$0xf]
        %v1123 = vld [vmem:[%s3 + $0x2c] sm:$0xf]
        %v1124 = vld [vmem:[%s3 + $0x30] sm:$0xf]
        %v1125 = vld [vmem:[%s3 + $0x34] sm:$0xf]
        %v1126 = vld [vmem:[%s3 + $0x38] sm:$0xf]
        %v1127 = vld [vmem:[%s3 + $0x3c] sm:$0xf]
        %v1128 = vld [vmem:[%s4] sm:$0x1]
        %v1130 = vlaneseq
        %v1131 = vshrl.u32 %v1130, 7
        %v1132 = vsub.s32 0, %v1131
        %v1133 = vrot.slane %v1128, %v1132
        %v1151 = vunpack.c.l.b16 %v1112
        %v1152 = vunpack.c.l.b16 %v1113
        %v1153 = vunpack.c.l.b16 %v1114
        %v1154 = vunpack.c.l.b16 %v1115
        %v1155 = vunpack.c.l.b16 %v1116
        %v1156 = vunpack.c.l.b16 %v1117
        %v1157 = vunpack.c.l.b16 %v1118
        %v1158 = vunpack.c.l.b16 %v1119
        %v1159 = vunpack.c.l.b16 %v1120
        %v1160 = vunpack.c.l.b16 %v1121
        %v1161 = vunpack.c.l.b16 %v1122
        %v1162 = vunpack.c.l.b16 %v1123
        %v1163 = vunpack.c.l.b16 %v1124
        %v1164 = vunpack.c.l.b16 %v1125
        %v1165 = vunpack.c.l.b16 %v1126
        %v1166 = vunpack.c.l.b16 %v1127
        %v1167 = vpack.c.b16 %v1152, %v1151
        %v1168 = vpack.c.b16 %v1154, %v1153
        %v1169 = vpack.c.b16 %v1156, %v1155
        %v1170 = vpack.c.b16 %v1158, %v1157
        %v1171 = vpack.c.b16 %v1160, %v1159
        %v1172 = vpack.c.b16 %v1162, %v1161
        %v1173 = vpack.c.b16 %v1164, %v1163
        %v1174 = vpack.c.b16 %v1166, %v1165
        %1183 = vmatprep.subr.bf16.mxu0 0
        %1184 = vmatpush1.bf16.msra.mxu0 %v1167
        %1185 = vmatprep.subr.bf16.mxu0 0
        %1186 = vmatpush1.bf16.msra.mxu0 %v1168
        %1187 = vmatprep.subr.bf16.mxu0 0
        %1188 = vmatpush1.bf16.msra.mxu0 %v1169
        %1189 = vmatprep.subr.bf16.mxu0 0
        %1190 = vmatpush1.bf16.msra.mxu0 %v1170
        %1191 = vmatprep.subr.bf16.mxu0 0
        %1192 = vmatpush1.bf16.msra.mxu0 %v1171
        %1193 = vmatprep.subr.bf16.mxu0 0
        %1194 = vmatpush1.bf16.msra.mxu0 %v1172
        %1195 = vmatprep.subr.bf16.mxu0 0
        %1196 = vmatpush1.bf16.msra.mxu0 %v1173
        %1197 = vmatprep.subr.bf16.mxu0 0
        %1198 = vmatpush1.bf16.msra.mxu0 %v1174
        %1199 = vmatprep.subr.bf16.mxu0 0
        %1200 = vmatpush1.bf16.msra.mxu0 0
        %1201 = vmatprep.subr.bf16.mxu0 0
        %1202 = vmatpush1.bf16.msra.mxu0 0
        %1203 = vmatprep.subr.bf16.mxu0 0
        %1204 = vmatpush1.bf16.msra.mxu0 0
        %1205 = vmatprep.subr.bf16.mxu0 0
        %1206 = vmatpush1.bf16.msra.mxu0 0
        %1207 = vmatprep.subr.bf16.mxu0 0
        %1208 = vmatpush1.bf16.msra.mxu0 0
        %1209 = vmatprep.subr.bf16.mxu0 0
        %1210 = vmatpush1.bf16.msra.mxu0 0
        %1211 = vmatprep.subr.bf16.mxu0 0
        %1212 = vmatpush1.bf16.msra.mxu0 0
        %1213 = vmatprep.subr.bf16.mxu0 0
        %1214 = vmatpush1.bf16.msra.mxu0 0
        %1215 = vmatprep.mubr.bf16.mxu0 0
        %1216 = vmatmul.mubr.bf16.gmra.mrb[0].mxu0 %v1080
        %v1217 = vpop.f32.mrb[0].mxu0
        %v1218 = vadd.f32 %v1133, %v1217
        %v1219 = vpop.f32.mrb[0].mxu0
        %v1220 = vpop.f32.mrb[0].mxu0
        %v1221 = vadd.f32 %v1133, %v1220
        %v1222 = vpop.f32.mrb[0].mxu0
        %1223 = vmatprep.mubr.bf16.mxu0 0
        %1224 = vmatmul.mubr.bf16.gmra.mrb[0].mxu0 %v1081
        %v1225 = vpop.f32.mrb[0].mxu0
        %v1226 = vadd.f32 %v1133, %v1225
        %v1227 = vpop.f32.mrb[0].mxu0
        %v1228 = vpop.f32.mrb[0].mxu0
        %v1229 = vadd.f32 %v1133, %v1228
        %v1230 = vpop.f32.mrb[0].mxu0
        %1231 = vmatprep.mubr.bf16.mxu0 0
        %1232 = vmatmul.mubr.bf16.gmra.mrb[0].mxu0 %v1082
        %v1233 = vpop.f32.mrb[0].mxu0
        %v1234 = vadd.f32 %v1133, %v1233
        %v1235 = vpop.f32.mrb[0].mxu0
        %v1236 = vpop.f32.mrb[0].mxu0
        %v1237 = vadd.f32 %v1133, %v1236
        %v1238 = vpop.f32.mrb[0].mxu0
        %1239 = vmatprep.mubr.bf16.mxu0 0
        %1240 = vmatmul.mubr.bf16.gmra.mrb[0].mxu0 %v1083
        %v1241 = vpop.f32.mrb[0].mxu0
        %v1242 = vadd.f32 %v1133, %v1241
        %v1243 = vpop.f32.mrb[0].mxu0
        %v1244 = vpop.f32.mrb[0].mxu0
        %v1245 = vadd.f32 %v1133, %v1244
        %v1246 = vpop.f32.mrb[0].mxu0
        %1247 = vmatprep.mubr.bf16.mxu0 0
        %1248 = vmatmul.mubr.bf16.gmra.mrb[0].mxu0 %v1084
        %v1249 = vpop.f32.mrb[0].mxu0
        %v1250 = vadd.f32 %v1133, %v1249
        %v1251 = vpop.f32.mrb[0].mxu0
        %v1252 = vpop.f32.mrb[0].mxu0
        %v1253 = vadd.f32 %v1133, %v1252
        %v1254 = vpop.f32.mrb[0].mxu0
        %1255 = vmatprep.mubr.bf16.mxu0 0
        %1256 = vmatmul.mubr.bf16.gmra.mrb[0].mxu0 %v1085
        %v1257 = vpop.f32.mrb[0].mxu0
        %v1258 = vadd.f32 %v1133, %v1257
        %v1259 = vpop.f32.mrb[0].mxu0
        %v1260 = vpop.f32.mrb[0].mxu0
        %v1261 = vadd.f32 %v1133, %v1260
        %v1262 = vpop.f32.mrb[0].mxu0
        %1263 = vmatprep.mubr.bf16.mxu0 0
        %1264 = vmatmul.mubr.bf16.gmra.mrb[0].mxu0 %v1086
        %v1265 = vpop.f32.mrb[0].mxu0
        %v1266 = vadd.f32 %v1133, %v1265
        %v1267 = vpop.f32.mrb[0].mxu0
        %v1268 = vpop.f32.mrb[0].mxu0
        %v1269 = vadd.f32 %v1133, %v1268
        %v1270 = vpop.f32.mrb[0].mxu0
        %1271 = vmatprep.mubr.bf16.mxu0 0
        %1272 = vmatmul.mubr.bf16.gmra.mrb[0].mxu0 %v1087
        %v1273 = vpop.f32.mrb[0].mxu0
        %v1274 = vadd.f32 %v1133, %v1273
        %v1275 = vpop.f32.mrb[0].mxu0
        %v1276 = vpop.f32.mrb[0].mxu0
        %v1277 = vadd.f32 %v1133, %v1276
        %v1278 = vpop.f32.mrb[0].mxu0
        %1279 = vmatprep.mubr.bf16.mxu0 0
        %1280 = vmatmul.mubr.bf16.gmra.mrb[0].mxu0 %v1088
        %v1281 = vpop.f32.mrb[0].mxu0
        %v1282 = vadd.f32 %v1133, %v1281
        %v1283 = vpop.f32.mrb[0].mxu0
        %v1284 = vpop.f32.mrb[0].mxu0
        %v1285 = vadd.f32 %v1133, %v1284
        %v1286 = vpop.f32.mrb[0].mxu0
        %1287 = vmatprep.mubr.bf16.mxu0 0
        %1288 = vmatmul.mubr.bf16.gmra.mrb[0].mxu0 %v1089
        %v1289 = vpop.f32.mrb[0].mxu0
        %v1290 = vadd.f32 %v1133, %v1289
        %v1291 = vpop.f32.mrb[0].mxu0
        %v1292 = vpop.f32.mrb[0].mxu0
        %v1293 = vadd.f32 %v1133, %v1292
        %v1294 = vpop.f32.mrb[0].mxu0
        %1295 = vmatprep.mubr.bf16.mxu0 0
        %1296 = vmatmul.mubr.bf16.gmra.mrb[0].mxu0 %v1090
        %v1297 = vpop.f32.mrb[0].mxu0
        %v1298 = vadd.f32 %v1133, %v1297
        %v1299 = vpop.f32.mrb[0].mxu0
        %v1300 = vpop.f32.mrb[0].mxu0
        %v1301 = vadd.f32 %v1133, %v1300
        %v1302 = vpop.f32.mrb[0].mxu0
        %1303 = vmatprep.mubr.bf16.mxu0 0
        %1304 = vmatmul.mubr.bf16.gmra.mrb[0].mxu0 %v1091
        %v1305 = vpop.f32.mrb[0].mxu0
        %v1306 = vadd.f32 %v1133, %v1305
        %v1307 = vpop.f32.mrb[0].mxu0
        %v1308 = vpop.f32.mrb[0].mxu0
        %v1309 = vadd.f32 %v1133, %v1308
        %v1310 = vpop.f32.mrb[0].mxu0
        %1311 = vmatprep.mubr.bf16.mxu0 0
        %1312 = vmatmul.mubr.bf16.gmra.mrb[0].mxu0 %v1092
        %v1313 = vpop.f32.mrb[0].mxu0
        %v1314 = vadd.f32 %v1133, %v1313
        %v1315 = vpop.f32.mrb[0].mxu0
        %v1316 = vpop.f32.mrb[0].mxu0
        %v1317 = vadd.f32 %v1133, %v1316
        %v1318 = vpop.f32.mrb[0].mxu0
        %1319 = vmatprep.mubr.bf16.mxu0 0
        %1320 = vmatmul.mubr.bf16.gmra.mrb[0].mxu0 %v1093
        %v1321 = vpop.f32.mrb[0].mxu0
        %v1322 = vadd.f32 %v1133, %v1321
        %v1323 = vpop.f32.mrb[0].mxu0
        %v1324 = vpop.f32.mrb[0].mxu0
        %v1325 = vadd.f32 %v1133, %v1324
        %v1326 = vpop.f32.mrb[0].mxu0
        %1327 = vmatprep.mubr.bf16.mxu0 0
        %1328 = vmatmul.mubr.bf16.gmra.mrb[0].mxu0 %v1094
        %v1329 = vpop.f32.mrb[0].mxu0
        %v1330 = vadd.f32 %v1133, %v1329
        %v1331 = vpop.f32.mrb[0].mxu0
        %v1332 = vpop.f32.mrb[0].mxu0
        %v1333 = vadd.f32 %v1133, %v1332
        %v1334 = vpop.f32.mrb[0].mxu0
        %1335 = vmatprep.mubr.bf16.mxu0 0
        %1336 = vmatmul.mubr.bf16.gmra.mrb[0].mxu0 %v1095
        %v1337 = vpop.f32.mrb[0].mxu0
        %v1338 = vadd.f32 %v1133, %v1337
        %v1339 = vpop.f32.mrb[0].mxu0
        %v1340 = vpop.f32.mrb[0].mxu0
        %v1341 = vadd.f32 %v1133, %v1340
        %v1342 = vpop.f32.mrb[0].mxu0
        %1343 = vmatprep.mubr.bf16.mxu0 0
        %1344 = vmatmul.mubr.bf16.gmra.mrb[0].mxu0 %v1096
        %v1345 = vpop.f32.mrb[0].mxu0
        %v1346 = vadd.f32 %v1133, %v1345
        %v1347 = vpop.f32.mrb[0].mxu0
        %v1348 = vpop.f32.mrb[0].mxu0
        %v1349 = vadd.f32 %v1133, %v1348
        %v1350 = vpop.f32.mrb[0].mxu0
        %1351 = vmatprep.mubr.bf16.mxu0 0
        %1352 = vmatmul.mubr.bf16.gmra.mrb[0].mxu0 %v1097
        %v1353 = vpop.f32.mrb[0].mxu0
        %v1354 = vadd.f32 %v1133, %v1353
        %v1355 = vpop.f32.mrb[0].mxu0
        %v1356 = vpop.f32.mrb[0].mxu0
        %v1357 = vadd.f32 %v1133, %v1356
        %v1358 = vpop.f32.mrb[0].mxu0
        %1359 = vmatprep.mubr.bf16.mxu0 0
        %1360 = vmatmul.mubr.bf16.gmra.mrb[0].mxu0 %v1098
        %v1361 = vpop.f32.mrb[0].mxu0
        %v1362 = vadd.f32 %v1133, %v1361
        %v1363 = vpop.f32.mrb[0].mxu0
        %v1364 = vpop.f32.mrb[0].mxu0
        %v1365 = vadd.f32 %v1133, %v1364
        %v1366 = vpop.f32.mrb[0].mxu0
        %1367 = vmatprep.mubr.bf16.mxu0 0
        %1368 = vmatmul.mubr.bf16.gmra.mrb[0].mxu0 %v1099
        %v1369 = vpop.f32.mrb[0].mxu0
        %v1370 = vadd.f32 %v1133, %v1369
        %v1371 = vpop.f32.mrb[0].mxu0
        %v1372 = vpop.f32.mrb[0].mxu0
        %v1373 = vadd.f32 %v1133, %v1372
        %v1374 = vpop.f32.mrb[0].mxu0
        %1375 = vmatprep.mubr.bf16.mxu0 0
        %1376 = vmatmul.mubr.bf16.gmra.mrb[0].mxu0 %v1100
        %v1377 = vpop.f32.mrb[0].mxu0
        %v1378 = vadd.f32 %v1133, %v1377
        %v1379 = vpop.f32.mrb[0].mxu0
        %v1380 = vpop.f32.mrb[0].mxu0
        %v1381 = vadd.f32 %v1133, %v1380
        %v1382 = vpop.f32.mrb[0].mxu0
        %1383 = vmatprep.mubr.bf16.mxu0 0
        %1384 = vmatmul.mubr.bf16.gmra.mrb[0].mxu0 %v1101
        %v1385 = vpop.f32.mrb[0].mxu0
        %v1386 = vadd.f32 %v1133, %v1385
        %v1387 = vpop.f32.mrb[0].mxu0
        %v1388 = vpop.f32.mrb[0].mxu0
        %v1389 = vadd.f32 %v1133, %v1388
        %v1390 = vpop.f32.mrb[0].mxu0
        %1391 = vmatprep.mubr.bf16.mxu0 0
        %1392 = vmatmul.mubr.bf16.gmra.mrb[0].mxu0 %v1102
        %v1393 = vpop.f32.mrb[0].mxu0
        %v1394 = vadd.f32 %v1133, %v1393
        %v1395 = vpop.f32.mrb[0].mxu0
        %v1396 = vpop.f32.mrb[0].mxu0
        %v1397 = vadd.f32 %v1133, %v1396
        %v1398 = vpop.f32.mrb[0].mxu0
        %1399 = vmatprep.mubr.bf16.mxu0 0
        %1400 = vmatmul.mubr.bf16.gmra.mrb[0].mxu0 %v1103
        %v1401 = vpop.f32.mrb[0].mxu0
        %v1402 = vadd.f32 %v1133, %v1401
        %v1403 = vpop.f32.mrb[0].mxu0
        %v1404 = vpop.f32.mrb[0].mxu0
        %v1405 = vadd.f32 %v1133, %v1404
        %v1406 = vpop.f32.mrb[0].mxu0
        %1407 = vmatprep.mubr.bf16.mxu0 0
        %1408 = vmatmul.mubr.bf16.gmra.mrb[0].mxu0 %v1104
        %v1409 = vpop.f32.mrb[0].mxu0
        %v1410 = vadd.f32 %v1133, %v1409
        %v1411 = vpop.f32.mrb[0].mxu0
        %v1412 = vpop.f32.mrb[0].mxu0
        %v1413 = vadd.f32 %v1133, %v1412
        %v1414 = vpop.f32.mrb[0].mxu0
        %1415 = vmatprep.mubr.bf16.mxu0 0
        %1416 = vmatmul.mubr.bf16.gmra.mrb[0].mxu0 %v1105
        %v1417 = vpop.f32.mrb[0].mxu0
        %v1418 = vadd.f32 %v1133, %v1417
        %v1419 = vpop.f32.mrb[0].mxu0
        %v1420 = vpop.f32.mrb[0].mxu0
        %v1421 = vadd.f32 %v1133, %v1420
        %v1422 = vpop.f32.mrb[0].mxu0
        %1423 = vmatprep.mubr.bf16.mxu0 0
        %1424 = vmatmul.mubr.bf16.gmra.mrb[0].mxu0 %v1106
        %v1425 = vpop.f32.mrb[0].mxu0
        %v1426 = vadd.f32 %v1133, %v1425
        %v1427 = vpop.f32.mrb[0].mxu0
        %v1428 = vpop.f32.mrb[0].mxu0
        %v1429 = vadd.f32 %v1133, %v1428
        %v1430 = vpop.f32.mrb[0].mxu0
        %1431 = vmatprep.mubr.bf16.mxu0 0
        %1432 = vmatmul.mubr.bf16.gmra.mrb[0].mxu0 %v1107
        %v1433 = vpop.f32.mrb[0].mxu0
        %v1434 = vadd.f32 %v1133, %v1433
        %v1435 = vpop.f32.mrb[0].mxu0
        %v1436 = vpop.f32.mrb[0].mxu0
        %v1437 = vadd.f32 %v1133, %v1436
        %v1438 = vpop.f32.mrb[0].mxu0
        %1439 = vmatprep.mubr.bf16.mxu0 0
        %1440 = vmatmul.mubr.bf16.gmra.mrb[0].mxu0 %v1108
        %v1441 = vpop.f32.mrb[0].mxu0
        %v1442 = vadd.f32 %v1133, %v1441
        %v1443 = vpop.f32.mrb[0].mxu0
        %v1444 = vpop.f32.mrb[0].mxu0
        %v1445 = vadd.f32 %v1133, %v1444
        %v1446 = vpop.f32.mrb[0].mxu0
        %1447 = vmatprep.mubr.bf16.mxu0 0
        %1448 = vmatmul.mubr.bf16.gmra.mrb[0].mxu0 %v1109
        %v1449 = vpop.f32.mrb[0].mxu0
        %v1450 = vadd.f32 %v1133, %v1449
        %v1451 = vpop.f32.mrb[0].mxu0
        %v1452 = vpop.f32.mrb[0].mxu0
        %v1453 = vadd.f32 %v1133, %v1452
        %v1454 = vpop.f32.mrb[0].mxu0
        %1455 = vmatprep.mubr.bf16.mxu0 0
        %1456 = vmatmul.mubr.bf16.gmra.mrb[0].mxu0 %v1110
        %v1457 = vpop.f32.mrb[0].mxu0
        %v1458 = vadd.f32 %v1133, %v1457
        %v1459 = vpop.f32.mrb[0].mxu0
        %v1460 = vpop.f32.mrb[0].mxu0
        %v1461 = vadd.f32 %v1133, %v1460
        %v1462 = vpop.f32.mrb[0].mxu0
        %1463 = vmatprep.mubr.bf16.mxu0 0
        %1464 = vmatmul.mubr.bf16.gmra.mrb[0].mxu0 %v1111
        %v1465 = vpop.f32.mrb[0].mxu0
        %v1466 = vadd.f32 %v1133, %v1465
        %v1467 = vpop.f32.mrb[0].mxu0
        %v1468 = vpop.f32.mrb[0].mxu0
        %v1469 = vpop.f32.mrb[0].mxu0
        %1470 = vdwg.mxu0
        %v1471 = vmax.f32 %v1218, 0.0
        %v1472 = vmax.f32 %v1221, 0.0
        %v1473 = vmax.f32 %v1226, 0.0
        %v1474 = vmax.f32 %v1229, 0.0
        %v1475 = vmax.f32 %v1234, 0.0
        %v1476 = vmax.f32 %v1237, 0.0
        %v1477 = vmax.f32 %v1242, 0.0
        %v1478 = vmax.f32 %v1245, 0.0
        %v1479 = vmax.f32 %v1250, 0.0
        %v1480 = vmax.f32 %v1253, 0.0
        %v1481 = vmax.f32 %v1258, 0.0
        %v1482 = vmax.f32 %v1261, 0.0
        %v1483 = vmax.f32 %v1266, 0.0
        %v1484 = vmax.f32 %v1269, 0.0
        %v1485 = vmax.f32 %v1274, 0.0
        %v1486 = vmax.f32 %v1277, 0.0
        %v1487 = vmax.f32 %v1282, 0.0
        %v1488 = vmax.f32 %v1285, 0.0
        %v1489 = vmax.f32 %v1290, 0.0
        %v1490 = vmax.f32 %v1293, 0.0
        %v1491 = vmax.f32 %v1298, 0.0
        %v1492 = vmax.f32 %v1301, 0.0
        %v1493 = vmax.f32 %v1306, 0.0
        %v1494 = vmax.f32 %v1309, 0.0
        %v1495 = vmax.f32 %v1314, 0.0
        %v1496 = vmax.f32 %v1317, 0.0
        %v1497 = vmax.f32 %v1322, 0.0
        %v1498 = vmax.f32 %v1325, 0.0
        %v1499 = vmax.f32 %v1330, 0.0
        %v1500 = vmax.f32 %v1333, 0.0
        %v1501 = vmax.f32 %v1338, 0.0
        %v1502 = vmax.f32 %v1341, 0.0
        %v1503 = vmax.f32 %v1346, 0.0
        %v1504 = vmax.f32 %v1349, 0.0
        %v1505 = vmax.f32 %v1354, 0.0
        %v1506 = vmax.f32 %v1357, 0.0
        %v1507 = vmax.f32 %v1362, 0.0
        %v1508 = vmax.f32 %v1365, 0.0
        %v1509 = vmax.f32 %v1370, 0.0
        %v1510 = vmax.f32 %v1373, 0.0
        %v1511 = vmax.f32 %v1378, 0.0
        %v1512 = vmax.f32 %v1381, 0.0
        %v1513 = vmax.f32 %v1386, 0.0
        %v1514 = vmax.f32 %v1389, 0.0
        %v1515 = vmax.f32 %v1394, 0.0
        %v1516 = vmax.f32 %v1397, 0.0
        %v1517 = vmax.f32 %v1402, 0.0
        %v1518 = vmax.f32 %v1405, 0.0
        %v1519 = vmax.f32 %v1410, 0.0
        %v1520 = vmax.f32 %v1413, 0.0
        %v1521 = vmax.f32 %v1418, 0.0
        %v1522 = vmax.f32 %v1421, 0.0
        %v1523 = vmax.f32 %v1426, 0.0
        %v1524 = vmax.f32 %v1429, 0.0
        %v1525 = vmax.f32 %v1434, 0.0
        %v1526 = vmax.f32 %v1437, 0.0
        %v1527 = vmax.f32 %v1442, 0.0
        %v1528 = vmax.f32 %v1445, 0.0
        %v1529 = vmax.f32 %v1450, 0.0
        %v1530 = vmax.f32 %v1453, 0.0
        %v1531 = vmax.f32 %v1458, 0.0
        %v1532 = vmax.f32 %v1461, 0.0
        %v1533 = vmax.f32 %v1466, 0.0
        %v1534 = vpack.c.bf16 %v1472, %v1471
        %v1535 = vpack.c.bf16 %v1474, %v1473
        %v1536 = vpack.c.bf16 %v1476, %v1475
        %v1537 = vpack.c.bf16 %v1478, %v1477
        %v1538 = vpack.c.bf16 %v1480, %v1479
        %v1539 = vpack.c.bf16 %v1482, %v1481
        %v1540 = vpack.c.bf16 %v1484, %v1483
        %v1541 = vpack.c.bf16 %v1486, %v1485
        %v1542 = vpack.c.bf16 %v1488, %v1487
        %v1543 = vpack.c.bf16 %v1490, %v1489
        %v1544 = vpack.c.bf16 %v1492, %v1491
        %v1545 = vpack.c.bf16 %v1494, %v1493
        %v1546 = vpack.c.bf16 %v1496, %v1495
        %v1547 = vpack.c.bf16 %v1498, %v1497
        %v1548 = vpack.c.bf16 %v1500, %v1499
        %v1549 = vpack.c.bf16 %v1502, %v1501
        %v1550 = vpack.c.bf16 %v1504, %v1503
        %v1551 = vpack.c.bf16 %v1506, %v1505
        %v1552 = vpack.c.bf16 %v1508, %v1507
        %v1553 = vpack.c.bf16 %v1510, %v1509
        %v1554 = vpack.c.bf16 %v1512, %v1511
        %v1555 = vpack.c.bf16 %v1514, %v1513
        %v1556 = vpack.c.bf16 %v1516, %v1515
        %v1557 = vpack.c.bf16 %v1518, %v1517
        %v1558 = vpack.c.bf16 %v1520, %v1519
        %v1559 = vpack.c.bf16 %v1522, %v1521
        %v1560 = vpack.c.bf16 %v1524, %v1523
        %v1561 = vpack.c.bf16 %v1526, %v1525
        %v1562 = vpack.c.bf16 %v1528, %v1527
        %v1563 = vpack.c.bf16 %v1530, %v1529
        %v1564 = vpack.c.bf16 %v1532, %v1531
        %v1565 = vpack.c.bf16 %v1533, %v1533
        %v1566 = vld [vmem:[%s5] sm:$0xf]
        %v1567 = vld [vmem:[%s5 + $0x4] sm:$0xf]
        %v1568 = vld [vmem:[%s5 + $0x8] sm:$0xf]
        %v1569 = vld [vmem:[%s5 + $0xc] sm:$0xf]
        %v1570 = vld [vmem:[%s5 + $0x10] sm:$0xf]
        %v1571 = vld [vmem:[%s5 + $0x14] sm:$0xf]
        %v1572 = vld [vmem:[%s5 + $0x18] sm:$0xf]
        %v1573 = vld [vmem:[%s5 + $0x1c] sm:$0xf]
        %v1574 = vld [vmem:[%s5 + $0x20] sm:$0xf]
        %v1575 = vld [vmem:[%s5 + $0x24] sm:$0xf]
        %v1576 = vld [vmem:[%s5 + $0x28] sm:$0xf]
        %v1577 = vld [vmem:[%s5 + $0x2c] sm:$0xf]
        %v1578 = vld [vmem:[%s5 + $0x30] sm:$0xf]
        %v1579 = vld [vmem:[%s5 + $0x34] sm:$0xf]
        %v1580 = vld [vmem:[%s5 + $0x38] sm:$0xf]
        %v1581 = vld [vmem:[%s5 + $0x3c] sm:$0xf]
        %v1582 = vld [vmem:[%s6] sm:$0x1]
        %v1584 = vlaneseq
        %v1585 = vshrl.u32 %v1584, 7
        %v1586 = vsub.s32 0, %v1585
        %v1587 = vrot.slane %v1582, %v1586
        %v1605 = vunpack.c.l.b16 %v1566
        %v1606 = vunpack.c.l.b16 %v1567
        %v1607 = vunpack.c.l.b16 %v1568
        %v1608 = vunpack.c.l.b16 %v1569
        %v1609 = vunpack.c.l.b16 %v1570
        %v1610 = vunpack.c.l.b16 %v1571
        %v1611 = vunpack.c.l.b16 %v1572
        %v1612 = vunpack.c.l.b16 %v1573
        %v1613 = vunpack.c.l.b16 %v1574
        %v1614 = vunpack.c.l.b16 %v1575
        %v1615 = vunpack.c.l.b16 %v1576
        %v1616 = vunpack.c.l.b16 %v1577
        %v1617 = vunpack.c.l.b16 %v1578
        %v1618 = vunpack.c.l.b16 %v1579
        %v1619 = vunpack.c.l.b16 %v1580
        %v1620 = vunpack.c.l.b16 %v1581
        %v1621 = vpack.c.b16 %v1606, %v1605
        %v1622 = vpack.c.b16 %v1608, %v1607
        %v1623 = vpack.c.b16 %v1610, %v1609
        %v1624 = vpack.c.b16 %v1612, %v1611
        %v1625 = vpack.c.b16 %v1614, %v1613
        %v1626 = vpack.c.b16 %v1616, %v1615
        %v1627 = vpack.c.b16 %v1618, %v1617
        %v1628 = vpack.c.b16 %v1620, %v1619
        %1637 = vmatprep.subr.bf16.mxu0 0
        %1638 = vmatpush1.bf16.msra.mxu0 %v1621
        %1639 = vmatprep.subr.bf16.mxu0 0
        %1640 = vmatpush1.bf16.msra.mxu0 %v1622
        %1641 = vmatprep.subr.bf16.mxu0 0
        %1642 = vmatpush1.bf16.msra.mxu0 %v1623
        %1643 = vmatprep.subr.bf16.mxu0 0
        %1644 = vmatpush1.bf16.msra.mxu0 %v1624
        %1645 = vmatprep.subr.bf16.mxu0 0
        %1646 = vmatpush1.bf16.msra.mxu0 %v1625
        %1647 = vmatprep.subr.bf16.mxu0 0
        %1648 = vmatpush1.bf16.msra.mxu0 %v1626
        %1649 = vmatprep.subr.bf16.mxu0 0
        %1650 = vmatpush1.bf16.msra.mxu0 %v1627
        %1651 = vmatprep.subr.bf16.mxu0 0
        %1652 = vmatpush1.bf16.msra.mxu0 %v1628
        %1653 = vmatprep.subr.bf16.mxu0 0
        %1654 = vmatpush1.bf16.msra.mxu0 0
        %1655 = vmatprep.subr.bf16.mxu0 0
        %1656 = vmatpush1.bf16.msra.mxu0 0
        %1657 = vmatprep.subr.bf16.mxu0 0
        %1658 = vmatpush1.bf16.msra.mxu0 0
        %1659 = vmatprep.subr.bf16.mxu0 0
        %1660 = vmatpush1.bf16.msra.mxu0 0
        %1661 = vmatprep.subr.bf16.mxu0 0
        %1662 = vmatpush1.bf16.msra.mxu0 0
        %1663 = vmatprep.subr.bf16.mxu0 0
        %1664 = vmatpush1.bf16.msra.mxu0 0
        %1665 = vmatprep.subr.bf16.mxu0 0
        %1666 = vmatpush1.bf16.msra.mxu0 0
        %1667 = vmatprep.subr.bf16.mxu0 0
        %1668 = vmatpush1.bf16.msra.mxu0 0
        %1669 = vmatprep.mubr.bf16.mxu0 0
        %1670 = vmatmul.mubr.bf16.gmra.mrb[0].mxu0 %v1534
        %v1671 = vpop.f32.mrb[0].mxu0
        %v1672 = vadd.f32 %v1587, %v1671
        %v1673 = vpop.f32.mrb[0].mxu0
        %v1674 = vpop.f32.mrb[0].mxu0
        %v1675 = vadd.f32 %v1587, %v1674
        %v1676 = vpop.f32.mrb[0].mxu0
        %1677 = vmatprep.mubr.bf16.mxu0 0
        %1678 = vmatmul.mubr.bf16.gmra.mrb[0].mxu0 %v1535
        %v1679 = vpop.f32.mrb[0].mxu0
        %v1680 = vadd.f32 %v1587, %v1679
        %v1681 = vpop.f32.mrb[0].mxu0
        %v1682 = vpop.f32.mrb[0].mxu0
        %v1683 = vadd.f32 %v1587, %v1682
        %v1684 = vpop.f32.mrb[0].mxu0
        %1685 = vmatprep.mubr.bf16.mxu0 0
        %1686 = vmatmul.mubr.bf16.gmra.mrb[0].mxu0 %v1536
        %v1687 = vpop.f32.mrb[0].mxu0
        %v1688 = vadd.f32 %v1587, %v1687
        %v1689 = vpop.f32.mrb[0].mxu0
        %v1690 = vpop.f32.mrb[0].mxu0
        %v1691 = vadd.f32 %v1587, %v1690
        %v1692 = vpop.f32.mrb[0].mxu0
        %1693 = vmatprep.mubr.bf16.mxu0 0
        %1694 = vmatmul.mubr.bf16.gmra.mrb[0].mxu0 %v1537
        %v1695 = vpop.f32.mrb[0].mxu0
        %v1696 = vadd.f32 %v1587, %v1695
        %v1697 = vpop.f32.mrb[0].mxu0
        %v1698 = vpop.f32.mrb[0].mxu0
        %v1699 = vadd.f32 %v1587, %v1698
        %v1700 = vpop.f32.mrb[0].mxu0
        %1701 = vmatprep.mubr.bf16.mxu0 0
        %1702 = vmatmul.mubr.bf16.gmra.mrb[0].mxu0 %v1538
        %v1703 = vpop.f32.mrb[0].mxu0
        %v1704 = vadd.f32 %v1587, %v1703
        %v1705 = vpop.f32.mrb[0].mxu0
        %v1706 = vpop.f32.mrb[0].mxu0
        %v1707 = vadd.f32 %v1587, %v1706
        %v1708 = vpop.f32.mrb[0].mxu0
        %1709 = vmatprep.mubr.bf16.mxu0 0
        %1710 = vmatmul.mubr.bf16.gmra.mrb[0].mxu0 %v1539
        %v1711 = vpop.f32.mrb[0].mxu0
        %v1712 = vadd.f32 %v1587, %v1711
        %v1713 = vpop.f32.mrb[0].mxu0
        %v1714 = vpop.f32.mrb[0].mxu0
        %v1715 = vadd.f32 %v1587, %v1714
        %v1716 = vpop.f32.mrb[0].mxu0
        %1717 = vmatprep.mubr.bf16.mxu0 0
        %1718 = vmatmul.mubr.bf16.gmra.mrb[0].mxu0 %v1540
        %v1719 = vpop.f32.mrb[0].mxu0
        %v1720 = vadd.f32 %v1587, %v1719
        %v1721 = vpop.f32.mrb[0].mxu0
        %v1722 = vpop.f32.mrb[0].mxu0
        %v1723 = vadd.f32 %v1587, %v1722
        %v1724 = vpop.f32.mrb[0].mxu0
        %1725 = vmatprep.mubr.bf16.mxu0 0
        %1726 = vmatmul.mubr.bf16.gmra.mrb[0].mxu0 %v1541
        %v1727 = vpop.f32.mrb[0].mxu0
        %v1728 = vadd.f32 %v1587, %v1727
        %v1729 = vpop.f32.mrb[0].mxu0
        %v1730 = vpop.f32.mrb[0].mxu0
        %v1731 = vadd.f32 %v1587, %v1730
        %v1732 = vpop.f32.mrb[0].mxu0
        %1733 = vmatprep.mubr.bf16.mxu0 0
        %1734 = vmatmul.mubr.bf16.gmra.mrb[0].mxu0 %v1542
        %v1735 = vpop.f32.mrb[0].mxu0
        %v1736 = vadd.f32 %v1587, %v1735
        %v1737 = vpop.f32.mrb[0].mxu0
        %v1738 = vpop.f32.mrb[0].mxu0
        %v1739 = vadd.f32 %v1587, %v1738
        %v1740 = vpop.f32.mrb[0].mxu0
        %1741 = vmatprep.mubr.bf16.mxu0 0
        %1742 = vmatmul.mubr.bf16.gmra.mrb[0].mxu0 %v1543
        %v1743 = vpop.f32.mrb[0].mxu0
        %v1744 = vadd.f32 %v1587, %v1743
        %v1745 = vpop.f32.mrb[0].mxu0
        %v1746 = vpop.f32.mrb[0].mxu0
        %v1747 = vadd.f32 %v1587, %v1746
        %v1748 = vpop.f32.mrb[0].mxu0
        %1749 = vmatprep.mubr.bf16.mxu0 0
        %1750 = vmatmul.mubr.bf16.gmra.mrb[0].mxu0 %v1544
        %v1751 = vpop.f32.mrb[0].mxu0
        %v1752 = vadd.f32 %v1587, %v1751
        %v1753 = vpop.f32.mrb[0].mxu0
        %v1754 = vpop.f32.mrb[0].mxu0
        %v1755 = vadd.f32 %v1587, %v1754
        %v1756 = vpop.f32.mrb[0].mxu0
        %1757 = vmatprep.mubr.bf16.mxu0 0
        %1758 = vmatmul.mubr.bf16.gmra.mrb[0].mxu0 %v1545
        %v1759 = vpop.f32.mrb[0].mxu0
        %v1760 = vadd.f32 %v1587, %v1759
        %v1761 = vpop.f32.mrb[0].mxu0
        %v1762 = vpop.f32.mrb[0].mxu0
        %v1763 = vadd.f32 %v1587, %v1762
        %v1764 = vpop.f32.mrb[0].mxu0
        %1765 = vmatprep.mubr.bf16.mxu0 0
        %1766 = vmatmul.mubr.bf16.gmra.mrb[0].mxu0 %v1546
        %v1767 = vpop.f32.mrb[0].mxu0
        %v1768 = vadd.f32 %v1587, %v1767
        %v1769 = vpop.f32.mrb[0].mxu0
        %v1770 = vpop.f32.mrb[0].mxu0
        %v1771 = vadd.f32 %v1587, %v1770
        %v1772 = vpop.f32.mrb[0].mxu0
        %1773 = vmatprep.mubr.bf16.mxu0 0
        %1774 = vmatmul.mubr.bf16.gmra.mrb[0].mxu0 %v1547
        %v1775 = vpop.f32.mrb[0].mxu0
        %v1776 = vadd.f32 %v1587, %v1775
        %v1777 = vpop.f32.mrb[0].mxu0
        %v1778 = vpop.f32.mrb[0].mxu0
        %v1779 = vadd.f32 %v1587, %v1778
        %v1780 = vpop.f32.mrb[0].mxu0
        %1781 = vmatprep.mubr.bf16.mxu0 0
        %1782 = vmatmul.mubr.bf16.gmra.mrb[0].mxu0 %v1548
        %v1783 = vpop.f32.mrb[0].mxu0
        %v1784 = vadd.f32 %v1587, %v1783
        %v1785 = vpop.f32.mrb[0].mxu0
        %v1786 = vpop.f32.mrb[0].mxu0
        %v1787 = vadd.f32 %v1587, %v1786
        %v1788 = vpop.f32.mrb[0].mxu0
        %1789 = vmatprep.mubr.bf16.mxu0 0
        %1790 = vmatmul.mubr.bf16.gmra.mrb[0].mxu0 %v1549
        %v1791 = vpop.f32.mrb[0].mxu0
        %v1792 = vadd.f32 %v1587, %v1791
        %v1793 = vpop.f32.mrb[0].mxu0
        %v1794 = vpop.f32.mrb[0].mxu0
        %v1795 = vadd.f32 %v1587, %v1794
        %v1796 = vpop.f32.mrb[0].mxu0
        %1797 = vmatprep.mubr.bf16.mxu0 0
        %1798 = vmatmul.mubr.bf16.gmra.mrb[0].mxu0 %v1550
        %v1799 = vpop.f32.mrb[0].mxu0
        %v1800 = vadd.f32 %v1587, %v1799
        %v1801 = vpop.f32.mrb[0].mxu0
        %v1802 = vpop.f32.mrb[0].mxu0
        %v1803 = vadd.f32 %v1587, %v1802
        %v1804 = vpop.f32.mrb[0].mxu0
        %1805 = vmatprep.mubr.bf16.mxu0 0
        %1806 = vmatmul.mubr.bf16.gmra.mrb[0].mxu0 %v1551
        %v1807 = vpop.f32.mrb[0].mxu0
        %v1808 = vadd.f32 %v1587, %v1807
        %v1809 = vpop.f32.mrb[0].mxu0
        %v1810 = vpop.f32.mrb[0].mxu0
        %v1811 = vadd.f32 %v1587, %v1810
        %v1812 = vpop.f32.mrb[0].mxu0
        %1813 = vmatprep.mubr.bf16.mxu0 0
        %1814 = vmatmul.mubr.bf16.gmra.mrb[0].mxu0 %v1552
        %v1815 = vpop.f32.mrb[0].mxu0
        %v1816 = vadd.f32 %v1587, %v1815
        %v1817 = vpop.f32.mrb[0].mxu0
        %v1818 = vpop.f32.mrb[0].mxu0
        %v1819 = vadd.f32 %v1587, %v1818
        %v1820 = vpop.f32.mrb[0].mxu0
        %1821 = vmatprep.mubr.bf16.mxu0 0
        %1822 = vmatmul.mubr.bf16.gmra.mrb[0].mxu0 %v1553
        %v1823 = vpop.f32.mrb[0].mxu0
        %v1824 = vadd.f32 %v1587, %v1823
        %v1825 = vpop.f32.mrb[0].mxu0
        %v1826 = vpop.f32.mrb[0].mxu0
        %v1827 = vadd.f32 %v1587, %v1826
        %v1828 = vpop.f32.mrb[0].mxu0
        %1829 = vmatprep.mubr.bf16.mxu0 0
        %1830 = vmatmul.mubr.bf16.gmra.mrb[0].mxu0 %v1554
        %v1831 = vpop.f32.mrb[0].mxu0
        %v1832 = vadd.f32 %v1587, %v1831
        %v1833 = vpop.f32.mrb[0].mxu0
        %v1834 = vpop.f32.mrb[0].mxu0
        %v1835 = vadd.f32 %v1587, %v1834
        %v1836 = vpop.f32.mrb[0].mxu0
        %1837 = vmatprep.mubr.bf16.mxu0 0
        %1838 = vmatmul.mubr.bf16.gmra.mrb[0].mxu0 %v1555
        %v1839 = vpop.f32.mrb[0].mxu0
        %v1840 = vadd.f32 %v1587, %v1839
        %v1841 = vpop.f32.mrb[0].mxu0
        %v1842 = vpop.f32.mrb[0].mxu0
        %v1843 = vadd.f32 %v1587, %v1842
        %v1844 = vpop.f32.mrb[0].mxu0
        %1845 = vmatprep.mubr.bf16.mxu0 0
        %1846 = vmatmul.mubr.bf16.gmra.mrb[0].mxu0 %v1556
        %v1847 = vpop.f32.mrb[0].mxu0
        %v1848 = vadd.f32 %v1587, %v1847
        %v1849 = vpop.f32.mrb[0].mxu0
        %v1850 = vpop.f32.mrb[0].mxu0
        %v1851 = vadd.f32 %v1587, %v1850
        %v1852 = vpop.f32.mrb[0].mxu0
        %1853 = vmatprep.mubr.bf16.mxu0 0
        %1854 = vmatmul.mubr.bf16.gmra.mrb[0].mxu0 %v1557
        %v1855 = vpop.f32.mrb[0].mxu0
        %v1856 = vadd.f32 %v1587, %v1855
        %v1857 = vpop.f32.mrb[0].mxu0
        %v1858 = vpop.f32.mrb[0].mxu0
        %v1859 = vadd.f32 %v1587, %v1858
        %v1860 = vpop.f32.mrb[0].mxu0
        %1861 = vmatprep.mubr.bf16.mxu0 0
        %1862 = vmatmul.mubr.bf16.gmra.mrb[0].mxu0 %v1558
        %v1863 = vpop.f32.mrb[0].mxu0
        %v1864 = vadd.f32 %v1587, %v1863
        %v1865 = vpop.f32.mrb[0].mxu0
        %v1866 = vpop.f32.mrb[0].mxu0
        %v1867 = vadd.f32 %v1587, %v1866
        %v1868 = vpop.f32.mrb[0].mxu0
        %1869 = vmatprep.mubr.bf16.mxu0 0
        %1870 = vmatmul.mubr.bf16.gmra.mrb[0].mxu0 %v1559
        %v1871 = vpop.f32.mrb[0].mxu0
        %v1872 = vadd.f32 %v1587, %v1871
        %v1873 = vpop.f32.mrb[0].mxu0
        %v1874 = vpop.f32.mrb[0].mxu0
        %v1875 = vadd.f32 %v1587, %v1874
        %v1876 = vpop.f32.mrb[0].mxu0
        %1877 = vmatprep.mubr.bf16.mxu0 0
        %1878 = vmatmul.mubr.bf16.gmra.mrb[0].mxu0 %v1560
        %v1879 = vpop.f32.mrb[0].mxu0
        %v1880 = vadd.f32 %v1587, %v1879
        %v1881 = vpop.f32.mrb[0].mxu0
        %v1882 = vpop.f32.mrb[0].mxu0
        %v1883 = vadd.f32 %v1587, %v1882
        %v1884 = vpop.f32.mrb[0].mxu0
        %1885 = vmatprep.mubr.bf16.mxu0 0
        %1886 = vmatmul.mubr.bf16.gmra.mrb[0].mxu0 %v1561
        %v1887 = vpop.f32.mrb[0].mxu0
        %v1888 = vadd.f32 %v1587, %v1887
        %v1889 = vpop.f32.mrb[0].mxu0
        %v1890 = vpop.f32.mrb[0].mxu0
        %v1891 = vadd.f32 %v1587, %v1890
        %v1892 = vpop.f32.mrb[0].mxu0
        %1893 = vmatprep.mubr.bf16.mxu0 0
        %1894 = vmatmul.mubr.bf16.gmra.mrb[0].mxu0 %v1562
        %v1895 = vpop.f32.mrb[0].mxu0
        %v1896 = vadd.f32 %v1587, %v1895
        %v1897 = vpop.f32.mrb[0].mxu0
        %v1898 = vpop.f32.mrb[0].mxu0
        %v1899 = vadd.f32 %v1587, %v1898
        %v1900 = vpop.f32.mrb[0].mxu0
        %1901 = vmatprep.mubr.bf16.mxu0 0
        %1902 = vmatmul.mubr.bf16.gmra.mrb[0].mxu0 %v1563
        %v1903 = vpop.f32.mrb[0].mxu0
        %v1904 = vadd.f32 %v1587, %v1903
        %v1905 = vpop.f32.mrb[0].mxu0
        %v1906 = vpop.f32.mrb[0].mxu0
        %v1907 = vadd.f32 %v1587, %v1906
        %v1908 = vpop.f32.mrb[0].mxu0
        %1909 = vmatprep.mubr.bf16.mxu0 0
        %1910 = vmatmul.mubr.bf16.gmra.mrb[0].mxu0 %v1564
        %v1911 = vpop.f32.mrb[0].mxu0
        %v1912 = vadd.f32 %v1587, %v1911
        %v1913 = vpop.f32.mrb[0].mxu0
        %v1914 = vpop.f32.mrb[0].mxu0
        %v1915 = vadd.f32 %v1587, %v1914
        %v1916 = vpop.f32.mrb[0].mxu0
        %1917 = vmatprep.mubr.bf16.mxu0 0
        %1918 = vmatmul.mubr.bf16.gmra.mrb[0].mxu0 %v1565
        %v1919 = vpop.f32.mrb[0].mxu0
        %v1920 = vadd.f32 %v1587, %v1919
        %v1921 = vpop.f32.mrb[0].mxu0
        %v1922 = vpop.f32.mrb[0].mxu0
        %v1923 = vpop.f32.mrb[0].mxu0
        %1924 = vdwg.mxu0
        %v1925 = vmax.f32 %v1672, 0.0
        %v1926 = vmax.f32 %v1675, 0.0
        %v1927 = vmax.f32 %v1680, 0.0
        %v1928 = vmax.f32 %v1683, 0.0
        %v1929 = vmax.f32 %v1688, 0.0
        %v1930 = vmax.f32 %v1691, 0.0
        %v1931 = vmax.f32 %v1696, 0.0
        %v1932 = vmax.f32 %v1699, 0.0
        %v1933 = vmax.f32 %v1704, 0.0
        %v1934 = vmax.f32 %v1707, 0.0
        %v1935 = vmax.f32 %v1712, 0.0
        %v1936 = vmax.f32 %v1715, 0.0
        %v1937 = vmax.f32 %v1720, 0.0
        %v1938 = vmax.f32 %v1723, 0.0
        %v1939 = vmax.f32 %v1728, 0.0
        %v1940 = vmax.f32 %v1731, 0.0
        %v1941 = vmax.f32 %v1736, 0.0
        %v1942 = vmax.f32 %v1739, 0.0
        %v1943 = vmax.f32 %v1744, 0.0
        %v1944 = vmax.f32 %v1747, 0.0
        %v1945 = vmax.f32 %v1752, 0.0
        %v1946 = vmax.f32 %v1755, 0.0
        %v1947 = vmax.f32 %v1760, 0.0
        %v1948 = vmax.f32 %v1763, 0.0
        %v1949 = vmax.f32 %v1768, 0.0
        %v1950 = vmax.f32 %v1771, 0.0
        %v1951 = vmax.f32 %v1776, 0.0
        %v1952 = vmax.f32 %v1779, 0.0
        %v1953 = vmax.f32 %v1784, 0.0
        %v1954 = vmax.f32 %v1787, 0.0
        %v1955 = vmax.f32 %v1792, 0.0
        %v1956 = vmax.f32 %v1795, 0.0
        %v1957 = vmax.f32 %v1800, 0.0
        %v1958 = vmax.f32 %v1803, 0.0
        %v1959 = vmax.f32 %v1808, 0.0
        %v1960 = vmax.f32 %v1811, 0.0
        %v1961 = vmax.f32 %v1816, 0.0
        %v1962 = vmax.f32 %v1819, 0.0
        %v1963 = vmax.f32 %v1824, 0.0
        %v1964 = vmax.f32 %v1827, 0.0
        %v1965 = vmax.f32 %v1832, 0.0
        %v1966 = vmax.f32 %v1835, 0.0
        %v1967 = vmax.f32 %v1840, 0.0
        %v1968 = vmax.f32 %v1843, 0.0
        %v1969 = vmax.f32 %v1848, 0.0
        %v1970 = vmax.f32 %v1851, 0.0
        %v1971 = vmax.f32 %v1856, 0.0
        %v1972 = vmax.f32 %v1859, 0.0
        %v1973 = vmax.f32 %v1864, 0.0
        %v1974 = vmax.f32 %v1867, 0.0
        %v1975 = vmax.f32 %v1872, 0.0
        %v1976 = vmax.f32 %v1875, 0.0
        %v1977 = vmax.f32 %v1880, 0.0
        %v1978 = vmax.f32 %v1883, 0.0
        %v1979 = vmax.f32 %v1888, 0.0
        %v1980 = vmax.f32 %v1891, 0.0
        %v1981 = vmax.f32 %v1896, 0.0
        %v1982 = vmax.f32 %v1899, 0.0
        %v1983 = vmax.f32 %v1904, 0.0
        %v1984 = vmax.f32 %v1907, 0.0
        %v1985 = vmax.f32 %v1912, 0.0
        %v1986 = vmax.f32 %v1915, 0.0
        %v1987 = vmax.f32 %v1920, 0.0
        %v1988 = vpack.c.bf16 %v1926, %v1925
        %v1989 = vpack.c.bf16 %v1928, %v1927
        %v1990 = vpack.c.bf16 %v1930, %v1929
        %v1991 = vpack.c.bf16 %v1932, %v1931
        %v1992 = vpack.c.bf16 %v1934, %v1933
        %v1993 = vpack.c.bf16 %v1936, %v1935
        %v1994 = vpack.c.bf16 %v1938, %v1937
        %v1995 = vpack.c.bf16 %v1940, %v1939
        %v1996 = vpack.c.bf16 %v1942, %v1941
        %v1997 = vpack.c.bf16 %v1944, %v1943
        %v1998 = vpack.c.bf16 %v1946, %v1945
        %v1999 = vpack.c.bf16 %v1948, %v1947
        %v2000 = vpack.c.bf16 %v1950, %v1949
        %v2001 = vpack.c.bf16 %v1952, %v1951
        %v2002 = vpack.c.bf16 %v1954, %v1953
        %v2003 = vpack.c.bf16 %v1956, %v1955
        %v2004 = vpack.c.bf16 %v1958, %v1957
        %v2005 = vpack.c.bf16 %v1960, %v1959
        %v2006 = vpack.c.bf16 %v1962, %v1961
        %v2007 = vpack.c.bf16 %v1964, %v1963
        %v2008 = vpack.c.bf16 %v1966, %v1965
        %v2009 = vpack.c.bf16 %v1968, %v1967
        %v2010 = vpack.c.bf16 %v1970, %v1969
        %v2011 = vpack.c.bf16 %v1972, %v1971
        %v2012 = vpack.c.bf16 %v1974, %v1973
        %v2013 = vpack.c.bf16 %v1976, %v1975
        %v2014 = vpack.c.bf16 %v1978, %v1977
        %v2015 = vpack.c.bf16 %v1980, %v1979
        %v2016 = vpack.c.bf16 %v1982, %v1981
        %v2017 = vpack.c.bf16 %v1984, %v1983
        %v2018 = vpack.c.bf16 %v1986, %v1985
        %v2019 = vpack.c.bf16 %v1987, %v1987
        %v2020 = vld [vmem:[%s7] sm:$0xf]
        %v2021 = vld [vmem:[%s7 + $0x4] sm:$0xf]
        %v2022 = vld [vmem:[%s7 + $0x8] sm:$0xf]
        %v2023 = vld [vmem:[%s7 + $0xc] sm:$0xf]
        %v2024 = vld [vmem:[%s7 + $0x10] sm:$0xf]
        %v2025 = vld [vmem:[%s7 + $0x14] sm:$0xf]
        %v2026 = vld [vmem:[%s7 + $0x18] sm:$0xf]
        %v2027 = vld [vmem:[%s7 + $0x1c] sm:$0xf]
        %v2028 = vld [vmem:[%s7 + $0x20] sm:$0xf]
        %v2029 = vld [vmem:[%s7 + $0x24] sm:$0xf]
        %v2030 = vld [vmem:[%s7 + $0x28] sm:$0xf]
        %v2031 = vld [vmem:[%s7 + $0x2c] sm:$0xf]
        %v2032 = vld [vmem:[%s7 + $0x30] sm:$0xf]
        %v2033 = vld [vmem:[%s7 + $0x34] sm:$0xf]
        %v2034 = vld [vmem:[%s7 + $0x38] sm:$0xf]
        %v2035 = vld [vmem:[%s7 + $0x3c] sm:$0xf]
        %v2036 = vld [vmem:[%s8] sm:$0x1]
        %v2038 = vlaneseq
        %v2039 = vshrl.u32 %v2038, 7
        %v2040 = vsub.s32 0, %v2039
        %v2041 = vrot.slane %v2036, %v2040
        %v2059 = vunpack.c.l.b16 %v2020
        %v2060 = vunpack.c.l.b16 %v2021
        %v2061 = vunpack.c.l.b16 %v2022
        %v2062 = vunpack.c.l.b16 %v2023
        %v2063 = vunpack.c.l.b16 %v2024
        %v2064 = vunpack.c.l.b16 %v2025
        %v2065 = vunpack.c.l.b16 %v2026
        %v2066 = vunpack.c.l.b16 %v2027
        %v2067 = vunpack.c.l.b16 %v2028
        %v2068 = vunpack.c.l.b16 %v2029
        %v2069 = vunpack.c.l.b16 %v2030
        %v2070 = vunpack.c.l.b16 %v2031
        %v2071 = vunpack.c.l.b16 %v2032
        %v2072 = vunpack.c.l.b16 %v2033
        %v2073 = vunpack.c.l.b16 %v2034
        %v2074 = vunpack.c.l.b16 %v2035
        %v2075 = vpack.c.b16 %v2060, %v2059
        %v2076 = vpack.c.b16 %v2062, %v2061
        %v2077 = vpack.c.b16 %v2064, %v2063
        %v2078 = vpack.c.b16 %v2066, %v2065
        %v2079 = vpack.c.b16 %v2068, %v2067
        %v2080 = vpack.c.b16 %v2070, %v2069
        %v2081 = vpack.c.b16 %v2072, %v2071
        %v2082 = vpack.c.b16 %v2074, %v2073
        %2091 = vmatprep.subr.bf16.mxu0 0
        %2092 = vmatpush1.bf16.msra.mxu0 %v2075
        %2093 = vmatprep.subr.bf16.mxu0 0
        %2094 = vmatpush1.bf16.msra.mxu0 %v2076
        %2095 = vmatprep.subr.bf16.mxu0 0
        %2096 = vmatpush1.bf16.msra.mxu0 %v2077
        %2097 = vmatprep.subr.bf16.mxu0 0
        %2098 = vmatpush1.bf16.msra.mxu0 %v2078
        %2099 = vmatprep.subr.bf16.mxu0 0
        %2100 = vmatpush1.bf16.msra.mxu0 %v2079
        %2101 = vmatprep.subr.bf16.mxu0 0
        %2102 = vmatpush1.bf16.msra.mxu0 %v2080
        %2103 = vmatprep.subr.bf16.mxu0 0
        %2104 = vmatpush1.bf16.msra.mxu0 %v2081
        %2105 = vmatprep.subr.bf16.mxu0 0
        %2106 = vmatpush1.bf16.msra.mxu0 %v2082
        %2107 = vmatprep.subr.bf16.mxu0 0
        %2108 = vmatpush1.bf16.msra.mxu0 0
        %2109 = vmatprep.subr.bf16.mxu0 0
        %2110 = vmatpush1.bf16.msra.mxu0 0
        %2111 = vmatprep.subr.bf16.mxu0 0
        %2112 = vmatpush1.bf16.msra.mxu0 0
        %2113 = vmatprep.subr.bf16.mxu0 0
        %2114 = vmatpush1.bf16.msra.mxu0 0
        %2115 = vmatprep.subr.bf16.mxu0 0
        %2116 = vmatpush1.bf16.msra.mxu0 0
        %2117 = vmatprep.subr.bf16.mxu0 0
        %2118 = vmatpush1.bf16.msra.mxu0 0
        %2119 = vmatprep.subr.bf16.mxu0 0
        %2120 = vmatpush1.bf16.msra.mxu0 0
        %2121 = vmatprep.subr.bf16.mxu0 0
        %2122 = vmatpush1.bf16.msra.mxu0 0
        %2123 = vmatprep.mubr.bf16.mxu0 0
        %2124 = vmatmul.mubr.bf16.gmra.mrb[0].mxu0 %v1988
        %v2125 = vpop.f32.mrb[0].mxu0
        %v2126 = vadd.f32 %v2041, %v2125
        %v2127 = vpop.f32.mrb[0].mxu0
        %v2128 = vpop.f32.mrb[0].mxu0
        %v2129 = vadd.f32 %v2041, %v2128
        %v2130 = vpop.f32.mrb[0].mxu0
        %2131 = vmatprep.mubr.bf16.mxu0 0
        %2132 = vmatmul.mubr.bf16.gmra.mrb[0].mxu0 %v1989
        %v2133 = vpop.f32.mrb[0].mxu0
        %v2134 = vadd.f32 %v2041, %v2133
        %v2135 = vpop.f32.mrb[0].mxu0
        %v2136 = vpop.f32.mrb[0].mxu0
        %v2137 = vadd.f32 %v2041, %v2136
        %v2138 = vpop.f32.mrb[0].mxu0
        %2139 = vmatprep.mubr.bf16.mxu0 0
        %2140 = vmatmul.mubr.bf16.gmra.mrb[0].mxu0 %v1990
        %v2141 = vpop.f32.mrb[0].mxu0
        %v2142 = vadd.f32 %v2041, %v2141
        %v2143 = vpop.f32.mrb[0].mxu0
        %v2144 = vpop.f32.mrb[0].mxu0
        %v2145 = vadd.f32 %v2041, %v2144
        %v2146 = vpop.f32.mrb[0].mxu0
        %2147 = vmatprep.mubr.bf16.mxu0 0
        %2148 = vmatmul.mubr.bf16.gmra.mrb[0].mxu0 %v1991
        %v2149 = vpop.f32.mrb[0].mxu0
        %v2150 = vadd.f32 %v2041, %v2149
        %v2151 = vpop.f32.mrb[0].mxu0
        %v2152 = vpop.f32.mrb[0].mxu0
        %v2153 = vadd.f32 %v2041, %v2152
        %v2154 = vpop.f32.mrb[0].mxu0
        %2155 = vmatprep.mubr.bf16.mxu0 0
        %2156 = vmatmul.mubr.bf16.gmra.mrb[0].mxu0 %v1992
        %v2157 = vpop.f32.mrb[0].mxu0
        %v2158 = vadd.f32 %v2041, %v2157
        %v2159 = vpop.f32.mrb[0].mxu0
        %v2160 = vpop.f32.mrb[0].mxu0
        %v2161 = vadd.f32 %v2041, %v2160
        %v2162 = vpop.f32.mrb[0].mxu0
        %2163 = vmatprep.mubr.bf16.mxu0 0
        %2164 = vmatmul.mubr.bf16.gmra.mrb[0].mxu0 %v1993
        %v2165 = vpop.f32.mrb[0].mxu0
        %v2166 = vadd.f32 %v2041, %v2165
        %v2167 = vpop.f32.mrb[0].mxu0
        %v2168 = vpop.f32.mrb[0].mxu0
        %v2169 = vadd.f32 %v2041, %v2168
        %v2170 = vpop.f32.mrb[0].mxu0
        %2171 = vmatprep.mubr.bf16.mxu0 0
        %2172 = vmatmul.mubr.bf16.gmra.mrb[0].mxu0 %v1994
        %v2173 = vpop.f32.mrb[0].mxu0
        %v2174 = vadd.f32 %v2041, %v2173
        %v2175 = vpop.f32.mrb[0].mxu0
        %v2176 = vpop.f32.mrb[0].mxu0
        %v2177 = vadd.f32 %v2041, %v2176
        %v2178 = vpop.f32.mrb[0].mxu0
        %2179 = vmatprep.mubr.bf16.mxu0 0
        %2180 = vmatmul.mubr.bf16.gmra.mrb[0].mxu0 %v1995
        %v2181 = vpop.f32.mrb[0].mxu0
        %v2182 = vadd.f32 %v2041, %v2181
        %v2183 = vpop.f32.mrb[0].mxu0
        %v2184 = vpop.f32.mrb[0].mxu0
        %v2185 = vadd.f32 %v2041, %v2184
        %v2186 = vpop.f32.mrb[0].mxu0
        %2187 = vmatprep.mubr.bf16.mxu0 0
        %2188 = vmatmul.mubr.bf16.gmra.mrb[0].mxu0 %v1996
        %v2189 = vpop.f32.mrb[0].mxu0
        %v2190 = vadd.f32 %v2041, %v2189
        %v2191 = vpop.f32.mrb[0].mxu0
        %v2192 = vpop.f32.mrb[0].mxu0
        %v2193 = vadd.f32 %v2041, %v2192
        %v2194 = vpop.f32.mrb[0].mxu0
        %2195 = vmatprep.mubr.bf16.mxu0 0
        %2196 = vmatmul.mubr.bf16.gmra.mrb[0].mxu0 %v1997
        %v2197 = vpop.f32.mrb[0].mxu0
        %v2198 = vadd.f32 %v2041, %v2197
        %v2199 = vpop.f32.mrb[0].mxu0
        %v2200 = vpop.f32.mrb[0].mxu0
        %v2201 = vadd.f32 %v2041, %v2200
        %v2202 = vpop.f32.mrb[0].mxu0
        %2203 = vmatprep.mubr.bf16.mxu0 0
        %2204 = vmatmul.mubr.bf16.gmra.mrb[0].mxu0 %v1998
        %v2205 = vpop.f32.mrb[0].mxu0
        %v2206 = vadd.f32 %v2041, %v2205
        %v2207 = vpop.f32.mrb[0].mxu0
        %v2208 = vpop.f32.mrb[0].mxu0
        %v2209 = vadd.f32 %v2041, %v2208
        %v2210 = vpop.f32.mrb[0].mxu0
        %2211 = vmatprep.mubr.bf16.mxu0 0
        %2212 = vmatmul.mubr.bf16.gmra.mrb[0].mxu0 %v1999
        %v2213 = vpop.f32.mrb[0].mxu0
        %v2214 = vadd.f32 %v2041, %v2213
        %v2215 = vpop.f32.mrb[0].mxu0
        %v2216 = vpop.f32.mrb[0].mxu0
        %v2217 = vadd.f32 %v2041, %v2216
        %v2218 = vpop.f32.mrb[0].mxu0
        %2219 = vmatprep.mubr.bf16.mxu0 0
        %2220 = vmatmul.mubr.bf16.gmra.mrb[0].mxu0 %v2000
        %v2221 = vpop.f32.mrb[0].mxu0
        %v2222 = vadd.f32 %v2041, %v2221
        %v2223 = vpop.f32.mrb[0].mxu0
        %v2224 = vpop.f32.mrb[0].mxu0
        %v2225 = vadd.f32 %v2041, %v2224
        %v2226 = vpop.f32.mrb[0].mxu0
        %2227 = vmatprep.mubr.bf16.mxu0 0
        %2228 = vmatmul.mubr.bf16.gmra.mrb[0].mxu0 %v2001
        %v2229 = vpop.f32.mrb[0].mxu0
        %v2230 = vadd.f32 %v2041, %v2229
        %v2231 = vpop.f32.mrb[0].mxu0
        %v2232 = vpop.f32.mrb[0].mxu0
        %v2233 = vadd.f32 %v2041, %v2232
        %v2234 = vpop.f32.mrb[0].mxu0
        %2235 = vmatprep.mubr.bf16.mxu0 0
        %2236 = vmatmul.mubr.bf16.gmra.mrb[0].mxu0 %v2002
        %v2237 = vpop.f32.mrb[0].mxu0
        %v2238 = vadd.f32 %v2041, %v2237
        %v2239 = vpop.f32.mrb[0].mxu0
        %v2240 = vpop.f32.mrb[0].mxu0
        %v2241 = vadd.f32 %v2041, %v2240
        %v2242 = vpop.f32.mrb[0].mxu0
        %2243 = vmatprep.mubr.bf16.mxu0 0
        %2244 = vmatmul.mubr.bf16.gmra.mrb[0].mxu0 %v2003
        %v2245 = vpop.f32.mrb[0].mxu0
        %v2246 = vadd.f32 %v2041, %v2245
        %v2247 = vpop.f32.mrb[0].mxu0
        %v2248 = vpop.f32.mrb[0].mxu0
        %v2249 = vadd.f32 %v2041, %v2248
        %v2250 = vpop.f32.mrb[0].mxu0
        %2251 = vmatprep.mubr.bf16.mxu0 0
        %2252 = vmatmul.mubr.bf16.gmra.mrb[0].mxu0 %v2004
        %v2253 = vpop.f32.mrb[0].mxu0
        %v2254 = vadd.f32 %v2041, %v2253
        %v2255 = vpop.f32.mrb[0].mxu0
        %v2256 = vpop.f32.mrb[0].mxu0
        %v2257 = vadd.f32 %v2041, %v2256
        %v2258 = vpop.f32.mrb[0].mxu0
        %2259 = vmatprep.mubr.bf16.mxu0 0
        %2260 = vmatmul.mubr.bf16.gmra.mrb[0].mxu0 %v2005
        %v2261 = vpop.f32.mrb[0].mxu0
        %v2262 = vadd.f32 %v2041, %v2261
        %v2263 = vpop.f32.mrb[0].mxu0
        %v2264 = vpop.f32.mrb[0].mxu0
        %v2265 = vadd.f32 %v2041, %v2264
        %v2266 = vpop.f32.mrb[0].mxu0
        %2267 = vmatprep.mubr.bf16.mxu0 0
        %2268 = vmatmul.mubr.bf16.gmra.mrb[0].mxu0 %v2006
        %v2269 = vpop.f32.mrb[0].mxu0
        %v2270 = vadd.f32 %v2041, %v2269
        %v2271 = vpop.f32.mrb[0].mxu0
        %v2272 = vpop.f32.mrb[0].mxu0
        %v2273 = vadd.f32 %v2041, %v2272
        %v2274 = vpop.f32.mrb[0].mxu0
        %2275 = vmatprep.mubr.bf16.mxu0 0
        %2276 = vmatmul.mubr.bf16.gmra.mrb[0].mxu0 %v2007
        %v2277 = vpop.f32.mrb[0].mxu0
        %v2278 = vadd.f32 %v2041, %v2277
        %v2279 = vpop.f32.mrb[0].mxu0
        %v2280 = vpop.f32.mrb[0].mxu0
        %v2281 = vadd.f32 %v2041, %v2280
        %v2282 = vpop.f32.mrb[0].mxu0
        %2283 = vmatprep.mubr.bf16.mxu0 0
        %2284 = vmatmul.mubr.bf16.gmra.mrb[0].mxu0 %v2008
        %v2285 = vpop.f32.mrb[0].mxu0
        %v2286 = vadd.f32 %v2041, %v2285
        %v2287 = vpop.f32.mrb[0].mxu0
        %v2288 = vpop.f32.mrb[0].mxu0
        %v2289 = vadd.f32 %v2041, %v2288
        %v2290 = vpop.f32.mrb[0].mxu0
        %2291 = vmatprep.mubr.bf16.mxu0 0
        %2292 = vmatmul.mubr.bf16.gmra.mrb[0].mxu0 %v2009
        %v2293 = vpop.f32.mrb[0].mxu0
        %v2294 = vadd.f32 %v2041, %v2293
        %v2295 = vpop.f32.mrb[0].mxu0
        %v2296 = vpop.f32.mrb[0].mxu0
        %v2297 = vadd.f32 %v2041, %v2296
        %v2298 = vpop.f32.mrb[0].mxu0
        %2299 = vmatprep.mubr.bf16.mxu0 0
        %2300 = vmatmul.mubr.bf16.gmra.mrb[0].mxu0 %v2010
        %v2301 = vpop.f32.mrb[0].mxu0
        %v2302 = vadd.f32 %v2041, %v2301
        %v2303 = vpop.f32.mrb[0].mxu0
        %v2304 = vpop.f32.mrb[0].mxu0
        %v2305 = vadd.f32 %v2041, %v2304
        %v2306 = vpop.f32.mrb[0].mxu0
        %2307 = vmatprep.mubr.bf16.mxu0 0
        %2308 = vmatmul.mubr.bf16.gmra.mrb[0].mxu0 %v2011
        %v2309 = vpop.f32.mrb[0].mxu0
        %v2310 = vadd.f32 %v2041, %v2309
        %v2311 = vpop.f32.mrb[0].mxu0
        %v2312 = vpop.f32.mrb[0].mxu0
        %v2313 = vadd.f32 %v2041, %v2312
        %v2314 = vpop.f32.mrb[0].mxu0
        %2315 = vmatprep.mubr.bf16.mxu0 0
        %2316 = vmatmul.mubr.bf16.gmra.mrb[0].mxu0 %v2012
        %v2317 = vpop.f32.mrb[0].mxu0
        %v2318 = vadd.f32 %v2041, %v2317
        %v2319 = vpop.f32.mrb[0].mxu0
        %v2320 = vpop.f32.mrb[0].mxu0
        %v2321 = vadd.f32 %v2041, %v2320
        %v2322 = vpop.f32.mrb[0].mxu0
        %2323 = vmatprep.mubr.bf16.mxu0 0
        %2324 = vmatmul.mubr.bf16.gmra.mrb[0].mxu0 %v2013
        %v2325 = vpop.f32.mrb[0].mxu0
        %v2326 = vadd.f32 %v2041, %v2325
        %v2327 = vpop.f32.mrb[0].mxu0
        %v2328 = vpop.f32.mrb[0].mxu0
        %v2329 = vadd.f32 %v2041, %v2328
        %v2330 = vpop.f32.mrb[0].mxu0
        %2331 = vmatprep.mubr.bf16.mxu0 0
        %2332 = vmatmul.mubr.bf16.gmra.mrb[0].mxu0 %v2014
        %v2333 = vpop.f32.mrb[0].mxu0
        %v2334 = vadd.f32 %v2041, %v2333
        %v2335 = vpop.f32.mrb[0].mxu0
        %v2336 = vpop.f32.mrb[0].mxu0
        %v2337 = vadd.f32 %v2041, %v2336
        %v2338 = vpop.f32.mrb[0].mxu0
        %2339 = vmatprep.mubr.bf16.mxu0 0
        %2340 = vmatmul.mubr.bf16.gmra.mrb[0].mxu0 %v2015
        %v2341 = vpop.f32.mrb[0].mxu0
        %v2342 = vadd.f32 %v2041, %v2341
        %v2343 = vpop.f32.mrb[0].mxu0
        %v2344 = vpop.f32.mrb[0].mxu0
        %v2345 = vadd.f32 %v2041, %v2344
        %v2346 = vpop.f32.mrb[0].mxu0
        %2347 = vmatprep.mubr.bf16.mxu0 0
        %2348 = vmatmul.mubr.bf16.gmra.mrb[0].mxu0 %v2016
        %v2349 = vpop.f32.mrb[0].mxu0
        %v2350 = vadd.f32 %v2041, %v2349
        %v2351 = vpop.f32.mrb[0].mxu0
        %v2352 = vpop.f32.mrb[0].mxu0
        %v2353 = vadd.f32 %v2041, %v2352
        %v2354 = vpop.f32.mrb[0].mxu0
        %2355 = vmatprep.mubr.bf16.mxu0 0
        %2356 = vmatmul.mubr.bf16.gmra.mrb[0].mxu0 %v2017
        %v2357 = vpop.f32.mrb[0].mxu0
        %v2358 = vadd.f32 %v2041, %v2357
        %v2359 = vpop.f32.mrb[0].mxu0
        %v2360 = vpop.f32.mrb[0].mxu0
        %v2361 = vadd.f32 %v2041, %v2360
        %v2362 = vpop.f32.mrb[0].mxu0
        %2363 = vmatprep.mubr.bf16.mxu0 0
        %2364 = vmatmul.mubr.bf16.gmra.mrb[0].mxu0 %v2018
        %v2365 = vpop.f32.mrb[0].mxu0
        %v2366 = vadd.f32 %v2041, %v2365
        %v2367 = vpop.f32.mrb[0].mxu0
        %v2368 = vpop.f32.mrb[0].mxu0
        %v2369 = vadd.f32 %v2041, %v2368
        %v2370 = vpop.f32.mrb[0].mxu0
        %2371 = vmatprep.mubr.bf16.mxu0 0
        %2372 = vmatmul.mubr.bf16.gmra.mrb[0].mxu0 %v2019
        %v2373 = vpop.f32.mrb[0].mxu0
        %v2374 = vadd.f32 %v2041, %v2373
        %v2375 = vpop.f32.mrb[0].mxu0
        %v2376 = vpop.f32.mrb[0].mxu0
        %v2377 = vpop.f32.mrb[0].mxu0
        %2378 = vdwg.mxu0
        %vm2379 = vcmask 64512
        %2380 = vst.msk [vmem:[%s339] sm:$0xff] %vm2379, %v2126
        %2381 = vst.msk [vmem:[%s339 + $0x8] sm:$0xff] %vm2379, %v2129
        %2382 = vst.msk [vmem:[%s339 + $0x10] sm:$0xff] %vm2379, %v2134
        %2383 = vst.msk [vmem:[%s339 + $0x18] sm:$0xff] %vm2379, %v2137
        %2384 = vst.msk [vmem:[%s339 + $0x20] sm:$0xff] %vm2379, %v2142
        %2385 = vst.msk [vmem:[%s339 + $0x28] sm:$0xff] %vm2379, %v2145
        %2386 = vst.msk [vmem:[%s339 + $0x30] sm:$0xff] %vm2379, %v2150
        %2387 = vst.msk [vmem:[%s339 + $0x38] sm:$0xff] %vm2379, %v2153
        %2388 = vst.msk [vmem:[%s339 + $0x40] sm:$0xff] %vm2379, %v2158
        %2389 = vst.msk [vmem:[%s339 + $0x48] sm:$0xff] %vm2379, %v2161
        %2390 = vst.msk [vmem:[%s339 + $0x50] sm:$0xff] %vm2379, %v2166
        %2391 = vst.msk [vmem:[%s339 + $0x58] sm:$0xff] %vm2379, %v2169
        %2392 = vst.msk [vmem:[%s339 + $0x60] sm:$0xff] %vm2379, %v2174
        %2393 = vst.msk [vmem:[%s339 + $0x68] sm:$0xff] %vm2379, %v2177
        %2394 = vst.msk [vmem:[%s339 + $0x70] sm:$0xff] %vm2379, %v2182
        %2395 = vst.msk [vmem:[%s339 + $0x78] sm:$0xff] %vm2379, %v2185
        %2396 = vst.msk [vmem:[%s339 + $0x80] sm:$0xff] %vm2379, %v2190
        %2397 = vst.msk [vmem:[%s339 + $0x88] sm:$0xff] %vm2379, %v2193
        %2398 = vst.msk [vmem:[%s339 + $0x90] sm:$0xff] %vm2379, %v2198
        %2399 = vst.msk [vmem:[%s339 + $0x98] sm:$0xff] %vm2379, %v2201
        %2400 = vst.msk [vmem:[%s339 + $0xa0] sm:$0xff] %vm2379, %v2206
        %2401 = vst.msk [vmem:[%s339 + $0xa8] sm:$0xff] %vm2379, %v2209
        %2402 = vst.msk [vmem:[%s339 + $0xb0] sm:$0xff] %vm2379, %v2214
        %2403 = vst.msk [vmem:[%s339 + $0xb8] sm:$0xff] %vm2379, %v2217
        %2404 = vst.msk [vmem:[%s339 + $0xc0] sm:$0xff] %vm2379, %v2222
        %2405 = vst.msk [vmem:[%s339 + $0xc8] sm:$0xff] %vm2379, %v2225
        %2406 = vst.msk [vmem:[%s339 + $0xd0] sm:$0xff] %vm2379, %v2230
        %2407 = vst.msk [vmem:[%s339 + $0xd8] sm:$0xff] %vm2379, %v2233
        %2408 = vst.msk [vmem:[%s339 + $0xe0] sm:$0xff] %vm2379, %v2238
        %2409 = vst.msk [vmem:[%s339 + $0xe8] sm:$0xff] %vm2379, %v2241
        %2410 = vst.msk [vmem:[%s339 + $0xf0] sm:$0xff] %vm2379, %v2246
        %2411 = vst.msk [vmem:[%s339 + $0xf8] sm:$0xff] %vm2379, %v2249
        %2412 = vst.msk [vmem:[%s339 + $0x100] sm:$0xff] %vm2379, %v2254
        %2413 = vst.msk [vmem:[%s339 + $0x108] sm:$0xff] %vm2379, %v2257
        %2414 = vst.msk [vmem:[%s339 + $0x110] sm:$0xff] %vm2379, %v2262
        %2415 = vst.msk [vmem:[%s339 + $0x118] sm:$0xff] %vm2379, %v2265
        %2416 = vst.msk [vmem:[%s339 + $0x120] sm:$0xff] %vm2379, %v2270
        %2417 = vst.msk [vmem:[%s339 + $0x128] sm:$0xff] %vm2379, %v2273
        %2418 = vst.msk [vmem:[%s339 + $0x130] sm:$0xff] %vm2379, %v2278
        %2419 = vst.msk [vmem:[%s339 + $0x138] sm:$0xff] %vm2379, %v2281
        %2420 = vst.msk [vmem:[%s339 + $0x140] sm:$0xff] %vm2379, %v2286
        %2421 = vst.msk [vmem:[%s339 + $0x148] sm:$0xff] %vm2379, %v2289
        %2422 = vst.msk [vmem:[%s339 + $0x150] sm:$0xff] %vm2379, %v2294
        %2423 = vst.msk [vmem:[%s339 + $0x158] sm:$0xff] %vm2379, %v2297
        %2424 = vst.msk [vmem:[%s339 + $0x160] sm:$0xff] %vm2379, %v2302
        %2425 = vst.msk [vmem:[%s339 + $0x168] sm:$0xff] %vm2379, %v2305
        %2426 = vst.msk [vmem:[%s339 + $0x170] sm:$0xff] %vm2379, %v2310
        %2427 = vst.msk [vmem:[%s339 + $0x178] sm:$0xff] %vm2379, %v2313
        %2428 = vst.msk [vmem:[%s339 + $0x180] sm:$0xff] %vm2379, %v2318
        %2429 = vst.msk [vmem:[%s339 + $0x188] sm:$0xff] %vm2379, %v2321
        %2430 = vst.msk [vmem:[%s339 + $0x190] sm:$0xff] %vm2379, %v2326
        %2431 = vst.msk [vmem:[%s339 + $0x198] sm:$0xff] %vm2379, %v2329
        %2432 = vst.msk [vmem:[%s339 + $0x1a0] sm:$0xff] %vm2379, %v2334
        %2433 = vst.msk [vmem:[%s339 + $0x1a8] sm:$0xff] %vm2379, %v2337
        %2434 = vst.msk [vmem:[%s339 + $0x1b0] sm:$0xff] %vm2379, %v2342
        %2435 = vst.msk [vmem:[%s339 + $0x1b8] sm:$0xff] %vm2379, %v2345
        %2436 = vst.msk [vmem:[%s339 + $0x1c0] sm:$0xff] %vm2379, %v2350
        %2437 = vst.msk [vmem:[%s339 + $0x1c8] sm:$0xff] %vm2379, %v2353
        %2438 = vst.msk [vmem:[%s339 + $0x1d0] sm:$0xff] %vm2379, %v2358
        %2439 = vst.msk [vmem:[%s339 + $0x1d8] sm:$0xff] %vm2379, %v2361
        %2440 = vst.msk [vmem:[%s339 + $0x1e0] sm:$0xff] %vm2379, %v2366
        %2441 = vst.msk [vmem:[%s339 + $0x1e8] sm:$0xff] %vm2379, %v2369
        %2442 = vst.msk [vmem:[%s339 + $0x1f0] sm:$0xff] %vm2379, %v2374
        %s2443 = sand.u32 %s222, 1
        %s2444 = sand.u32 %s222, 1
        %s2445 = smul.addr %s2444, 504
        %s2446 = scalar_lea.vmem [#allocation2], %s2445
        // Predicated region
        $region57: #{mlp_forward.1} parent=55 // pred_check
          %p2447 = pneg %p232
        $region58: #{mlp_forward.1} parent=55 // pred_check_branch
          %2449 = sbr.rel (%p2447) target = $region60
        $region59: #{mlp_forward.1} parent=55 // pred_region
          %s2450 = smul.u32 63, %s20
          %s2451 = ssub.s32 125, %s2450
          %p2452 = scmp.lt.s32.totalorder %s2451, 63
          %s2453 = scalar_select %p2452, %s2451, 63
          %s2454 = smul.u32 128, %s2453
          %p2455 = scmp.ne.s32.totalorder 0, %s2454
          %s2456 = smul.addr %s2450, 8
          %s2457 = scalar_lea.vmem %s9, %s2456
          // Predicated region
          $region61: #{mlp_forward.1} parent=59 // pred_check
            %p2458 = pneg %p2455
          $region62: #{mlp_forward.1} parent=59 // pred_check_branch
            %2460 = sbr.rel (%p2458) target = $region64
          $region63: #{mlp_forward.1} parent=59 // pred_region
            // Predicated region
            $region65: #{mlp_forward.1} parent=63 // pred_check
              _
            $region66: #{mlp_forward.1} parent=63 // pred_check_branch
              %2462 = sbr.rel (0) target = $region68
            $region67: #{mlp_forward.1} parent=63 // pred_region
              // Predicated region
              $region87: #{mlp_forward.1} parent=67 // pred_check
                _
              $region88: #{mlp_forward.1} parent=67 // pred_check_branch
                %2636 = sbr.rel (0) target = $region90
              $region89: #{mlp_forward.1} parent=67 // pred_region
                %s2637 = sdiv.u32.pop %s2453, 63
                %s2638 = srem.u32.pop %s2453, 63
                // While loop
                $region91: #{mlp_forward.1} parent=89 // loop_pre_header
                  _
                $region92: #{mlp_forward.1} parent=89 // loop_header
                  %s2640 = sphi 0, %s2642
                  %p2641 = scmp.ge.s32.totalorder %s2640, %s2637
                  %s2645 = sphi 0, %s2776
                  %s2646 = sphi %s2446, %s2779
                  %s2647 = sphi %s2457, %s2780
                $region93: #{mlp_forward.1} parent=89 // loop_header_branch
                  %2644 = sbr.rel (%p2641) target = $region97
                $region94: #{mlp_forward.1} parent=89 // loop_body
                  %v2648 = vld [vmem:[%s2646] sm:$0xff]
                  %2649 = vst [vmem:[%s2647] sm:$0xff] %v2648
                  %v2650 = vld [vmem:[%s2646 + $0x8] sm:$0xff]
                  %2651 = vst [vmem:[%s2647 + $0x8] sm:$0xff] %v2650
                  %v2652 = vld [vmem:[%s2646 + $0x10] sm:$0xff]
                  %2653 = vst [vmem:[%s2647 + $0x10] sm:$0xff] %v2652
                  %v2654 = vld [vmem:[%s2646 + $0x18] sm:$0xff]
                  %2655 = vst [vmem:[%s2647 + $0x18] sm:$0xff] %v2654
                  %v2656 = vld [vmem:[%s2646 + $0x20] sm:$0xff]
                  %2657 = vst [vmem:[%s2647 + $0x20] sm:$0xff] %v2656
                  %v2658 = vld [vmem:[%s2646 + $0x28] sm:$0xff]
                  %2659 = vst [vmem:[%s2647 + $0x28] sm:$0xff] %v2658
                  %v2660 = vld [vmem:[%s2646 + $0x30] sm:$0xff]
                  %2661 = vst [vmem:[%s2647 + $0x30] sm:$0xff] %v2660
                  %v2662 = vld [vmem:[%s2646 + $0x38] sm:$0xff]
                  %2663 = vst [vmem:[%s2647 + $0x38] sm:$0xff] %v2662
                  %v2664 = vld [vmem:[%s2646 + $0x40] sm:$0xff]
                  %2665 = vst [vmem:[%s2647 + $0x40] sm:$0xff] %v2664
                  %v2666 = vld [vmem:[%s2646 + $0x48] sm:$0xff]
                  %2667 = vst [vmem:[%s2647 + $0x48] sm:$0xff] %v2666
                  %v2668 = vld [vmem:[%s2646 + $0x50] sm:$0xff]
                  %2669 = vst [vmem:[%s2647 + $0x50] sm:$0xff] %v2668
                  %v2670 = vld [vmem:[%s2646 + $0x58] sm:$0xff]
                  %2671 = vst [vmem:[%s2647 + $0x58] sm:$0xff] %v2670
                  %v2672 = vld [vmem:[%s2646 + $0x60] sm:$0xff]
                  %2673 = vst [vmem:[%s2647 + $0x60] sm:$0xff] %v2672
                  %v2674 = vld [vmem:[%s2646 + $0x68] sm:$0xff]
                  %2675 = vst [vmem:[%s2647 + $0x68] sm:$0xff] %v2674
                  %v2676 = vld [vmem:[%s2646 + $0x70] sm:$0xff]
                  %2677 = vst [vmem:[%s2647 + $0x70] sm:$0xff] %v2676
                  %v2678 = vld [vmem:[%s2646 + $0x78] sm:$0xff]
                  %2679 = vst [vmem:[%s2647 + $0x78] sm:$0xff] %v2678
                  %v2680 = vld [vmem:[%s2646 + $0x80] sm:$0xff]
                  %2681 = vst [vmem:[%s2647 + $0x80] sm:$0xff] %v2680
                  %v2682 = vld [vmem:[%s2646 + $0x88] sm:$0xff]
                  %2683 = vst [vmem:[%s2647 + $0x88] sm:$0xff] %v2682
                  %v2684 = vld [vmem:[%s2646 + $0x90] sm:$0xff]
                  %2685 = vst [vmem:[%s2647 + $0x90] sm:$0xff] %v2684
                  %v2686 = vld [vmem:[%s2646 + $0x98] sm:$0xff]
                  %2687 = vst [vmem:[%s2647 + $0x98] sm:$0xff] %v2686
                  %v2688 = vld [vmem:[%s2646 + $0xa0] sm:$0xff]
                  %2689 = vst [vmem:[%s2647 + $0xa0] sm:$0xff] %v2688
                  %v2690 = vld [vmem:[%s2646 + $0xa8] sm:$0xff]
                  %2691 = vst [vmem:[%s2647 + $0xa8] sm:$0xff] %v2690
                  %v2692 = vld [vmem:[%s2646 + $0xb0] sm:$0xff]
                  %2693 = vst [vmem:[%s2647 + $0xb0] sm:$0xff] %v2692
                  %v2694 = vld [vmem:[%s2646 + $0xb8] sm:$0xff]
                  %2695 = vst [vmem:[%s2647 + $0xb8] sm:$0xff] %v2694
                  %v2696 = vld [vmem:[%s2646 + $0xc0] sm:$0xff]
                  %2697 = vst [vmem:[%s2647 + $0xc0] sm:$0xff] %v2696
                  %v2698 = vld [vmem:[%s2646 + $0xc8] sm:$0xff]
                  %2699 = vst [vmem:[%s2647 + $0xc8] sm:$0xff] %v2698
                  %v2700 = vld [vmem:[%s2646 + $0xd0] sm:$0xff]
                  %2701 = vst [vmem:[%s2647 + $0xd0] sm:$0xff] %v2700
                  %v2702 = vld [vmem:[%s2646 + $0xd8] sm:$0xff]
                  %2703 = vst [vmem:[%s2647 + $0xd8] sm:$0xff] %v2702
                  %v2704 = vld [vmem:[%s2646 + $0xe0] sm:$0xff]
                  %2705 = vst [vmem:[%s2647 + $0xe0] sm:$0xff] %v2704
                  %v2706 = vld [vmem:[%s2646 + $0xe8] sm:$0xff]
                  %2707 = vst [vmem:[%s2647 + $0xe8] sm:$0xff] %v2706
                  %v2708 = vld [vmem:[%s2646 + $0xf0] sm:$0xff]
                  %2709 = vst [vmem:[%s2647 + $0xf0] sm:$0xff] %v2708
                  %v2710 = vld [vmem:[%s2646 + $0xf8] sm:$0xff]
                  %2711 = vst [vmem:[%s2647 + $0xf8] sm:$0xff] %v2710
                  %v2712 = vld [vmem:[%s2646 + $0x100] sm:$0xff]
                  %2713 = vst [vmem:[%s2647 + $0x100] sm:$0xff] %v2712
                  %v2714 = vld [vmem:[%s2646 + $0x108] sm:$0xff]
                  %2715 = vst [vmem:[%s2647 + $0x108] sm:$0xff] %v2714
                  %v2716 = vld [vmem:[%s2646 + $0x110] sm:$0xff]
                  %2717 = vst [vmem:[%s2647 + $0x110] sm:$0xff] %v2716
                  %v2718 = vld [vmem:[%s2646 + $0x118] sm:$0xff]
                  %2719 = vst [vmem:[%s2647 + $0x118] sm:$0xff] %v2718
                  %v2720 = vld [vmem:[%s2646 + $0x120] sm:$0xff]
                  %2721 = vst [vmem:[%s2647 + $0x120] sm:$0xff] %v2720
                  %v2722 = vld [vmem:[%s2646 + $0x128] sm:$0xff]
                  %2723 = vst [vmem:[%s2647 + $0x128] sm:$0xff] %v2722
                  %v2724 = vld [vmem:[%s2646 + $0x130] sm:$0xff]
                  %2725 = vst [vmem:[%s2647 + $0x130] sm:$0xff] %v2724
                  %v2726 = vld [vmem:[%s2646 + $0x138] sm:$0xff]
                  %2727 = vst [vmem:[%s2647 + $0x138] sm:$0xff] %v2726
                  %v2728 = vld [vmem:[%s2646 + $0x140] sm:$0xff]
                  %2729 = vst [vmem:[%s2647 + $0x140] sm:$0xff] %v2728
                  %v2730 = vld [vmem:[%s2646 + $0x148] sm:$0xff]
                  %2731 = vst [vmem:[%s2647 + $0x148] sm:$0xff] %v2730
                  %v2732 = vld [vmem:[%s2646 + $0x150] sm:$0xff]
                  %2733 = vst [vmem:[%s2647 + $0x150] sm:$0xff] %v2732
                  %v2734 = vld [vmem:[%s2646 + $0x158] sm:$0xff]
                  %2735 = vst [vmem:[%s2647 + $0x158] sm:$0xff] %v2734
                  %v2736 = vld [vmem:[%s2646 + $0x160] sm:$0xff]
                  %2737 = vst [vmem:[%s2647 + $0x160] sm:$0xff] %v2736
                  %v2738 = vld [vmem:[%s2646 + $0x168] sm:$0xff]
                  %2739 = vst [vmem:[%s2647 + $0x168] sm:$0xff] %v2738
                  %v2740 = vld [vmem:[%s2646 + $0x170] sm:$0xff]
                  %2741 = vst [vmem:[%s2647 + $0x170] sm:$0xff] %v2740
                  %v2742 = vld [vmem:[%s2646 + $0x178] sm:$0xff]
                  %2743 = vst [vmem:[%s2647 + $0x178] sm:$0xff] %v2742
                  %v2744 = vld [vmem:[%s2646 + $0x180] sm:$0xff]
                  %2745 = vst [vmem:[%s2647 + $0x180] sm:$0xff] %v2744
                  %v2746 = vld [vmem:[%s2646 + $0x188] sm:$0xff]
                  %2747 = vst [vmem:[%s2647 + $0x188] sm:$0xff] %v2746
                  %v2748 = vld [vmem:[%s2646 + $0x190] sm:$0xff]
                  %2749 = vst [vmem:[%s2647 + $0x190] sm:$0xff] %v2748
                  %v2750 = vld [vmem:[%s2646 + $0x198] sm:$0xff]
                  %2751 = vst [vmem:[%s2647 + $0x198] sm:$0xff] %v2750
                  %v2752 = vld [vmem:[%s2646 + $0x1a0] sm:$0xff]
                  %2753 = vst [vmem:[%s2647 + $0x1a0] sm:$0xff] %v2752
                  %v2754 = vld [vmem:[%s2646 + $0x1a8] sm:$0xff]
                  %2755 = vst [vmem:[%s2647 + $0x1a8] sm:$0xff] %v2754
                  %v2756 = vld [vmem:[%s2646 + $0x1b0] sm:$0xff]
                  %2757 = vst [vmem:[%s2647 + $0x1b0] sm:$0xff] %v2756
                  %v2758 = vld [vmem:[%s2646 + $0x1b8] sm:$0xff]
                  %2759 = vst [vmem:[%s2647 + $0x1b8] sm:$0xff] %v2758
                  %v2760 = vld [vmem:[%s2646 + $0x1c0] sm:$0xff]
                  %2761 = vst [vmem:[%s2647 + $0x1c0] sm:$0xff] %v2760
                  %v2762 = vld [vmem:[%s2646 + $0x1c8] sm:$0xff]
                  %2763 = vst [vmem:[%s2647 + $0x1c8] sm:$0xff] %v2762
                  %v2764 = vld [vmem:[%s2646 + $0x1d0] sm:$0xff]
                  %2765 = vst [vmem:[%s2647 + $0x1d0] sm:$0xff] %v2764
                  %v2766 = vld [vmem:[%s2646 + $0x1d8] sm:$0xff]
                  %2767 = vst [vmem:[%s2647 + $0x1d8] sm:$0xff] %v2766
                  %v2768 = vld [vmem:[%s2646 + $0x1e0] sm:$0xff]
                  %2769 = vst [vmem:[%s2647 + $0x1e0] sm:$0xff] %v2768
                  %v2770 = vld [vmem:[%s2646 + $0x1e8] sm:$0xff]
                  %2771 = vst [vmem:[%s2647 + $0x1e8] sm:$0xff] %v2770
                  %v2772 = vld [vmem:[%s2646 + $0x1f0] sm:$0xff]
                  %2773 = vst [vmem:[%s2647 + $0x1f0] sm:$0xff] %v2772
                  %s2774 = sadd.s32 1, %s2645
                  %p2775 = scmp.ge.s32.totalorder %s2774, %s2637
                  %s2776 = scalar_select %p2775, 0, %s2774
                  %s2777 = smul.u32 %s2776, 504
                  %s2778 = smul.u32 %s2776, 504
                  %s2779 = scalar_lea.vmem %s2446, %s2777 [#allocation2]
                  %s2780 = scalar_lea.vmem %s2457, %s2778
                $region95: #{mlp_forward.1} parent=89 // loop_footer
                  %s2642 = sadd.s32 %s2640, 1
                $region96: #{mlp_forward.1} parent=89 // loop_footer_branch
                  %2639 = sbr.rel target = $region92
                $region97: #{mlp_forward.1} parent=89 // loop_exit
                  _
                %s2781 = sdiv.u32.pop %s2453, 63
                %s2782 = srem.u32.pop %s2453, 63
                %s2783 = smul.u32 %s2781, 63
                %s2784 = smul.u32 8, %s2783
                %s2785 = scalar_lea.vmem %s2446, %s2784 [#allocation2]
                %s2786 = smul.u32 8, %s2783
                %s2787 = scalar_lea.vmem %s2457, %s2786
                // While loop
                $region98: #{mlp_forward.1} parent=89 // loop_pre_header
                  _
                $region99: #{mlp_forward.1} parent=89 // loop_header
                  %s2789 = sphi 0, %s2791
                  %p2790 = scmp.ge.s32.totalorder %s2789, %s2782
                  %s2794 = sphi 0, %s2801
                  %s2795 = sphi %s2785, %s2804
                  %s2796 = sphi %s2787, %s2805
                $region100: #{mlp_forward.1} parent=89 // loop_header_branch
                  %2793 = sbr.rel (%p2790) target = $region104
                $region101: #{mlp_forward.1} parent=89 // loop_body
                  %v2797 = vld [vmem:[%s2795] sm:$0xff]
                  %2798 = vst [vmem:[%s2796] sm:$0xff] %v2797
                  %s2799 = sadd.s32 1, %s2794
                  %p2800 = scmp.ge.s32.totalorder %s2799, %s2782
                  %s2801 = scalar_select %p2800, 0, %s2799
                  %s2802 = smul.u32 %s2801, 8
                  %s2803 = smul.u32 %s2801, 8
                  %s2804 = scalar_lea.vmem %s2785, %s2802 [#allocation2]
                  %s2805 = scalar_lea.vmem %s2787, %s2803
                $region102: #{mlp_forward.1} parent=89 // loop_footer
                  %s2791 = sadd.s32 %s2789, 1
                $region103: #{mlp_forward.1} parent=89 // loop_footer_branch
                  %2788 = sbr.rel target = $region99
                $region104: #{mlp_forward.1} parent=89 // loop_exit
                  _
              $region90: #{mlp_forward.1} parent=67 // pred_fallthru
                _
              // Predicated region
              $region105: #{mlp_forward.1} parent=67 // pred_check
                _
              $region106: #{mlp_forward.1} parent=67 // pred_check_branch
                %2807 = sbr.rel target = $region108
              $region107: #{mlp_forward.1} parent=67 // pred_region
                _
              $region108: #{mlp_forward.1} parent=67 // pred_fallthru
                _
            $region68: #{mlp_forward.1} parent=63 // pred_fallthru
              _
            // Predicated region
            $region69: #{mlp_forward.1} parent=63 // pred_check
              _
            $region70: #{mlp_forward.1} parent=63 // pred_check_branch
              %2464 = sbr.rel target = $region72
            $region71: #{mlp_forward.1} parent=63 // pred_region
              %s2466 = sdiv.u32.pop %s2453, 63
              %s2467 = srem.u32.pop %s2453, 63
              // While loop
              $region73: #{mlp_forward.1} parent=71 // loop_pre_header
                _
              $region74: #{mlp_forward.1} parent=71 // loop_header
                %s2469 = sphi 0, %s2471
                %p2470 = scmp.ge.s32.totalorder %s2469, %s2466
                %s2474 = sphi 0, %s2605
                %s2475 = sphi %s2446, %s2608
                %s2476 = sphi %s2457, %s2609
              $region75: #{mlp_forward.1} parent=71 // loop_header_branch
                %2473 = sbr.rel (%p2470) target = $region79
              $region76: #{mlp_forward.1} parent=71 // loop_body
                %v2477 = vld [vmem:[%s2475] sm:$0xff]
                %2478 = vst [vmem:[%s2476] sm:$0xff] %v2477
                %v2479 = vld [vmem:[%s2475 + $0x8] sm:$0xff]
                %2480 = vst [vmem:[%s2476 + $0x8] sm:$0xff] %v2479
                %v2481 = vld [vmem:[%s2475 + $0x10] sm:$0xff]
                %2482 = vst [vmem:[%s2476 + $0x10] sm:$0xff] %v2481
                %v2483 = vld [vmem:[%s2475 + $0x18] sm:$0xff]
                %2484 = vst [vmem:[%s2476 + $0x18] sm:$0xff] %v2483
                %v2485 = vld [vmem:[%s2475 + $0x20] sm:$0xff]
                %2486 = vst [vmem:[%s2476 + $0x20] sm:$0xff] %v2485
                %v2487 = vld [vmem:[%s2475 + $0x28] sm:$0xff]
                %2488 = vst [vmem:[%s2476 + $0x28] sm:$0xff] %v2487
                %v2489 = vld [vmem:[%s2475 + $0x30] sm:$0xff]
                %2490 = vst [vmem:[%s2476 + $0x30] sm:$0xff] %v2489
                %v2491 = vld [vmem:[%s2475 + $0x38] sm:$0xff]
                %2492 = vst [vmem:[%s2476 + $0x38] sm:$0xff] %v2491
                %v2493 = vld [vmem:[%s2475 + $0x40] sm:$0xff]
                %2494 = vst [vmem:[%s2476 + $0x40] sm:$0xff] %v2493
                %v2495 = vld [vmem:[%s2475 + $0x48] sm:$0xff]
                %2496 = vst [vmem:[%s2476 + $0x48] sm:$0xff] %v2495
                %v2497 = vld [vmem:[%s2475 + $0x50] sm:$0xff]
                %2498 = vst [vmem:[%s2476 + $0x50] sm:$0xff] %v2497
                %v2499 = vld [vmem:[%s2475 + $0x58] sm:$0xff]
                %2500 = vst [vmem:[%s2476 + $0x58] sm:$0xff] %v2499
                %v2501 = vld [vmem:[%s2475 + $0x60] sm:$0xff]
                %2502 = vst [vmem:[%s2476 + $0x60] sm:$0xff] %v2501
                %v2503 = vld [vmem:[%s2475 + $0x68] sm:$0xff]
                %2504 = vst [vmem:[%s2476 + $0x68] sm:$0xff] %v2503
                %v2505 = vld [vmem:[%s2475 + $0x70] sm:$0xff]
                %2506 = vst [vmem:[%s2476 + $0x70] sm:$0xff] %v2505
                %v2507 = vld [vmem:[%s2475 + $0x78] sm:$0xff]
                %2508 = vst [vmem:[%s2476 + $0x78] sm:$0xff] %v2507
                %v2509 = vld [vmem:[%s2475 + $0x80] sm:$0xff]
                %2510 = vst [vmem:[%s2476 + $0x80] sm:$0xff] %v2509
                %v2511 = vld [vmem:[%s2475 + $0x88] sm:$0xff]
                %2512 = vst [vmem:[%s2476 + $0x88] sm:$0xff] %v2511
                %v2513 = vld [vmem:[%s2475 + $0x90] sm:$0xff]
                %2514 = vst [vmem:[%s2476 + $0x90] sm:$0xff] %v2513
                %v2515 = vld [vmem:[%s2475 + $0x98] sm:$0xff]
                %2516 = vst [vmem:[%s2476 + $0x98] sm:$0xff] %v2515
                %v2517 = vld [vmem:[%s2475 + $0xa0] sm:$0xff]
                %2518 = vst [vmem:[%s2476 + $0xa0] sm:$0xff] %v2517
                %v2519 = vld [vmem:[%s2475 + $0xa8] sm:$0xff]
                %2520 = vst [vmem:[%s2476 + $0xa8] sm:$0xff] %v2519
                %v2521 = vld [vmem:[%s2475 + $0xb0] sm:$0xff]
                %2522 = vst [vmem:[%s2476 + $0xb0] sm:$0xff] %v2521
                %v2523 = vld [vmem:[%s2475 + $0xb8] sm:$0xff]
                %2524 = vst [vmem:[%s2476 + $0xb8] sm:$0xff] %v2523
                %v2525 = vld [vmem:[%s2475 + $0xc0] sm:$0xff]
                %2526 = vst [vmem:[%s2476 + $0xc0] sm:$0xff] %v2525
                %v2527 = vld [vmem:[%s2475 + $0xc8] sm:$0xff]
                %2528 = vst [vmem:[%s2476 + $0xc8] sm:$0xff] %v2527
                %v2529 = vld [vmem:[%s2475 + $0xd0] sm:$0xff]
                %2530 = vst [vmem:[%s2476 + $0xd0] sm:$0xff] %v2529
                %v2531 = vld [vmem:[%s2475 + $0xd8] sm:$0xff]
                %2532 = vst [vmem:[%s2476 + $0xd8] sm:$0xff] %v2531
                %v2533 = vld [vmem:[%s2475 + $0xe0] sm:$0xff]
                %2534 = vst [vmem:[%s2476 + $0xe0] sm:$0xff] %v2533
                %v2535 = vld [vmem:[%s2475 + $0xe8] sm:$0xff]
                %2536 = vst [vmem:[%s2476 + $0xe8] sm:$0xff] %v2535
                %v2537 = vld [vmem:[%s2475 + $0xf0] sm:$0xff]
                %2538 = vst [vmem:[%s2476 + $0xf0] sm:$0xff] %v2537
                %v2539 = vld [vmem:[%s2475 + $0xf8] sm:$0xff]
                %2540 = vst [vmem:[%s2476 + $0xf8] sm:$0xff] %v2539
                %v2541 = vld [vmem:[%s2475 + $0x100] sm:$0xff]
                %2542 = vst [vmem:[%s2476 + $0x100] sm:$0xff] %v2541
                %v2543 = vld [vmem:[%s2475 + $0x108] sm:$0xff]
                %2544 = vst [vmem:[%s2476 + $0x108] sm:$0xff] %v2543
                %v2545 = vld [vmem:[%s2475 + $0x110] sm:$0xff]
                %2546 = vst [vmem:[%s2476 + $0x110] sm:$0xff] %v2545
                %v2547 = vld [vmem:[%s2475 + $0x118] sm:$0xff]
                %2548 = vst [vmem:[%s2476 + $0x118] sm:$0xff] %v2547
                %v2549 = vld [vmem:[%s2475 + $0x120] sm:$0xff]
                %2550 = vst [vmem:[%s2476 + $0x120] sm:$0xff] %v2549
                %v2551 = vld [vmem:[%s2475 + $0x128] sm:$0xff]
                %2552 = vst [vmem:[%s2476 + $0x128] sm:$0xff] %v2551
                %v2553 = vld [vmem:[%s2475 + $0x130] sm:$0xff]
                %2554 = vst [vmem:[%s2476 + $0x130] sm:$0xff] %v2553
                %v2555 = vld [vmem:[%s2475 + $0x138] sm:$0xff]
                %2556 = vst [vmem:[%s2476 + $0x138] sm:$0xff] %v2555
                %v2557 = vld [vmem:[%s2475 + $0x140] sm:$0xff]
                %2558 = vst [vmem:[%s2476 + $0x140] sm:$0xff] %v2557
                %v2559 = vld [vmem:[%s2475 + $0x148] sm:$0xff]
                %2560 = vst [vmem:[%s2476 + $0x148] sm:$0xff] %v2559
                %v2561 = vld [vmem:[%s2475 + $0x150] sm:$0xff]
                %2562 = vst [vmem:[%s2476 + $0x150] sm:$0xff] %v2561
                %v2563 = vld [vmem:[%s2475 + $0x158] sm:$0xff]
                %2564 = vst [vmem:[%s2476 + $0x158] sm:$0xff] %v2563
                %v2565 = vld [vmem:[%s2475 + $0x160] sm:$0xff]
                %2566 = vst [vmem:[%s2476 + $0x160] sm:$0xff] %v2565
                %v2567 = vld [vmem:[%s2475 + $0x168] sm:$0xff]
                %2568 = vst [vmem:[%s2476 + $0x168] sm:$0xff] %v2567
                %v2569 = vld [vmem:[%s2475 + $0x170] sm:$0xff]
                %2570 = vst [vmem:[%s2476 + $0x170] sm:$0xff] %v2569
                %v2571 = vld [vmem:[%s2475 + $0x178] sm:$0xff]
                %2572 = vst [vmem:[%s2476 + $0x178] sm:$0xff] %v2571
                %v2573 = vld [vmem:[%s2475 + $0x180] sm:$0xff]
                %2574 = vst [vmem:[%s2476 + $0x180] sm:$0xff] %v2573
                %v2575 = vld [vmem:[%s2475 + $0x188] sm:$0xff]
                %2576 = vst [vmem:[%s2476 + $0x188] sm:$0xff] %v2575
                %v2577 = vld [vmem:[%s2475 + $0x190] sm:$0xff]
                %2578 = vst [vmem:[%s2476 + $0x190] sm:$0xff] %v2577
                %v2579 = vld [vmem:[%s2475 + $0x198] sm:$0xff]
                %2580 = vst [vmem:[%s2476 + $0x198] sm:$0xff] %v2579
                %v2581 = vld [vmem:[%s2475 + $0x1a0] sm:$0xff]
                %2582 = vst [vmem:[%s2476 + $0x1a0] sm:$0xff] %v2581
                %v2583 = vld [vmem:[%s2475 + $0x1a8] sm:$0xff]
                %2584 = vst [vmem:[%s2476 + $0x1a8] sm:$0xff] %v2583
                %v2585 = vld [vmem:[%s2475 + $0x1b0] sm:$0xff]
                %2586 = vst [vmem:[%s2476 + $0x1b0] sm:$0xff] %v2585
                %v2587 = vld [vmem:[%s2475 + $0x1b8] sm:$0xff]
                %2588 = vst [vmem:[%s2476 + $0x1b8] sm:$0xff] %v2587
                %v2589 = vld [vmem:[%s2475 + $0x1c0] sm:$0xff]
                %2590 = vst [vmem:[%s2476 + $0x1c0] sm:$0xff] %v2589
                %v2591 = vld [vmem:[%s2475 + $0x1c8] sm:$0xff]
                %2592 = vst [vmem:[%s2476 + $0x1c8] sm:$0xff] %v2591
                %v2593 = vld [vmem:[%s2475 + $0x1d0] sm:$0xff]
                %2594 = vst [vmem:[%s2476 + $0x1d0] sm:$0xff] %v2593
                %v2595 = vld [vmem:[%s2475 + $0x1d8] sm:$0xff]
                %2596 = vst [vmem:[%s2476 + $0x1d8] sm:$0xff] %v2595
                %v2597 = vld [vmem:[%s2475 + $0x1e0] sm:$0xff]
                %2598 = vst [vmem:[%s2476 + $0x1e0] sm:$0xff] %v2597
                %v2599 = vld [vmem:[%s2475 + $0x1e8] sm:$0xff]
                %2600 = vst [vmem:[%s2476 + $0x1e8] sm:$0xff] %v2599
                %v2601 = vld [vmem:[%s2475 + $0x1f0] sm:$0xff]
                %2602 = vst [vmem:[%s2476 + $0x1f0] sm:$0xff] %v2601
                %s2603 = sadd.s32 1, %s2474
                %p2604 = scmp.ge.s32.totalorder %s2603, %s2466
                %s2605 = scalar_select %p2604, 0, %s2603
                %s2606 = smul.u32 %s2605, 504
                %s2607 = smul.u32 %s2605, 504
                %s2608 = scalar_lea.vmem %s2446, %s2606 [#allocation2]
                %s2609 = scalar_lea.vmem %s2457, %s2607
              $region77: #{mlp_forward.1} parent=71 // loop_footer
                %s2471 = sadd.s32 %s2469, 1
              $region78: #{mlp_forward.1} parent=71 // loop_footer_branch
                %2468 = sbr.rel target = $region74
              $region79: #{mlp_forward.1} parent=71 // loop_exit
                _
              %s2610 = sdiv.u32.pop %s2453, 63
              %s2611 = srem.u32.pop %s2453, 63
              %s2612 = smul.u32 %s2610, 63
              %s2613 = smul.u32 8, %s2612
              %s2614 = scalar_lea.vmem %s2446, %s2613 [#allocation2]
              %s2615 = smul.u32 8, %s2612
              %s2616 = scalar_lea.vmem %s2457, %s2615
              // While loop
              $region80: #{mlp_forward.1} parent=71 // loop_pre_header
                _
              $region81: #{mlp_forward.1} parent=71 // loop_header
                %s2618 = sphi 0, %s2620
                %p2619 = scmp.ge.s32.totalorder %s2618, %s2611
                %s2623 = sphi 0, %s2630
                %s2624 = sphi %s2614, %s2633
                %s2625 = sphi %s2616, %s2634
              $region82: #{mlp_forward.1} parent=71 // loop_header_branch
                %2622 = sbr.rel (%p2619) target = $region86
              $region83: #{mlp_forward.1} parent=71 // loop_body
                %v2626 = vld [vmem:[%s2624] sm:$0xff]
                %2627 = vst [vmem:[%s2625] sm:$0xff] %v2626
                %s2628 = sadd.s32 1, %s2623
                %p2629 = scmp.ge.s32.totalorder %s2628, %s2611
                %s2630 = scalar_select %p2629, 0, %s2628
                %s2631 = smul.u32 %s2630, 8
                %s2632 = smul.u32 %s2630, 8
                %s2633 = scalar_lea.vmem %s2614, %s2631 [#allocation2]
                %s2634 = scalar_lea.vmem %s2616, %s2632
              $region84: #{mlp_forward.1} parent=71 // loop_footer
                %s2620 = sadd.s32 %s2618, 1
              $region85: #{mlp_forward.1} parent=71 // loop_footer_branch
                %2617 = sbr.rel target = $region81
              $region86: #{mlp_forward.1} parent=71 // loop_exit
                _
            $region72: #{mlp_forward.1} parent=63 // pred_fallthru
              _
          $region64: #{mlp_forward.1} parent=59 // pred_fallthru
            _
          %2808 = vnop
        $region60: #{mlp_forward.1} parent=55 // pred_fallthru
          _
      $region56: #{mlp_forward.1} parent=5 // pred_fallthru
        _
      %p2809 = scmp.le.s32.totalorder 2, %s15
      // Predicated region
      $region109: #{mlp_forward.1} parent=5 // pred_check
        %p2810 = pneg %p2809
      $region110: #{mlp_forward.1} parent=5 // pred_check_branch
        %2812 = sbr.rel (%p2810) target = $region112
      $region111: #{mlp_forward.1} parent=5 // pred_region
        %s2813 = ssub.s32 %s15, 2
        // Predicated region
        $region113: #{mlp_forward.1} parent=111 // pred_check
          %p2814 = pneg %p238
        $region114: #{mlp_forward.1} parent=111 // pred_check_branch
          %2816 = sbr.rel (%p2814) target = $region116
        $region115: #{mlp_forward.1} parent=111 // pred_region
          %s2817 = sand.u32 %s223, 1
          %s2818 = sand.u32 %s223, 1
          %s2819 = smul.addr %s2818, 504
          %s2820 = scalar_lea.vmem [#allocation2], %s2819
        $region116: #{mlp_forward.1} parent=111 // pred_fallthru
          _
      $region112: #{mlp_forward.1} parent=5 // pred_fallthru
        _
    $region6: #{mlp_forward.1} parent=1 // loop_footer
      %s19 = sadd.s32 1, %s15
    $region7: #{mlp_forward.1} parent=1 // loop_footer_branch
      %14 = sbr.rel target = $region3
    $region8: #{mlp_forward.1} parent=1 // loop_exit
      _

</llo_original>
